<compile_context>
chip_gen: v7x
topology: tpu7x:2x2x1
jax: 0.10.0
libtpu: 0.0.40
codegen_flags: <defaults>
</compile_context>

<pallas_src>
import functools

import jax
import jax.numpy as jnp
from jax.experimental import pallas as pl
from jax.experimental.pallas import tpu as pltpu


# --------------------------------------------------------------------------------------
# Fused GRUNet kernel: all layers + fc head in one invocation (no grid).
# --------------------------------------------------------------------------------------
def _grunet_kernel(x_ref, h0_ref, w0_ref, wrest_ref, u_ref, bx_ref, bhn_ref,
                   fcw_ref, fcb_ref,            # inputs
                   y_ref, hT_ref,               # outputs
                   seq_scratch,                 # VMEM scratch: (T*B, H)
                   *, n_layers, seq_len, batch, hidden):
    L, T, B, H = n_layers, seq_len, batch, hidden

    seq = x_ref[...]                              # (T*B, D_in) time-major rows, layer-0 input
    h = None
    for l in range(L):
        # Fused per-layer weights: columns ordered r | z | n.
        W = w0_ref[...] if l == 0 else wrest_ref[l - 1]   # (D_in, 3H)
        U = u_ref[l]                                      # (H, 3H)
        bx = bx_ref[l]                                    # (1, 3H)  = [b_ir+b_hr | b_iz+b_hz | b_in]
        bhn = bhn_ref[l]                                  # (1, H)

        # Hoisted input projection over the whole sequence: one MXU call, M = T*B.
        gx = jnp.dot(seq, W, preferred_element_type=jnp.float32) + bx   # (T*B, 3H)

        h = h0_ref[l]                                     # (B, H)
        for t in range(T):                                # fully unrolled serial recurrence
            rows = slice(t * B, (t + 1) * B)              # static, sublane-aligned
            gh = jnp.dot(h, U, preferred_element_type=jnp.float32)      # ONE fused gate matmul
            sx = gx[rows]                                 # (B, 3H)
            r = jax.nn.sigmoid(sx[:, 0:H] + gh[:, 0:H])
            z = jax.nn.sigmoid(sx[:, H:2 * H] + gh[:, H:2 * H])
            n = jnp.tanh(sx[:, 2 * H:] + r * (gh[:, 2 * H:] + bhn))     # b_hn inside r-multiply
            h = (1.0 - z) * n + z * h
            if l + 1 < L:
                seq_scratch[rows, :] = h                  # feed next layer via VMEM scratch

        hT_ref[l] = h                                     # final hidden of this layer
        if l + 1 < L:
            seq = seq_scratch[...]                        # (T*B, H) next layer's input

    # fc(relu(out[:, -1])): h is the top layer's hidden at the final timestep.
    last = jnp.maximum(h, 0.0)
    y_ref[...] = (jnp.dot(last, fcw_ref[...], preferred_element_type=jnp.float32)
                  + fcb_ref[...])


def gru_net_forward(x, h0, params):
    """x: (B, T, D) batch_first, h0: (L, B, H). Returns (y:(B, O), h:(L, B, H))."""
    B, T, D = x.shape
    L, _, H = h0.shape
    O = params["fc_w"].shape[-1]

    # Time-major row layout (row = t*B + b) so the hoisted projection result can be
    # consumed per-step with contiguous, sublane-aligned row slices.
    x_flat = jnp.transpose(x, (1, 0, 2)).reshape(T * B, D)

    inputs = [x_flat, h0,
              params["w0"], params["w_rest"], params["u"],
              params["bx"], params["bhn"],
              params["fc_w"], params["fc_b"]]

    def full_spec(a):
        nd = a.ndim
        return pl.BlockSpec(a.shape, lambda *_: (0,) * nd)

    kernel = functools.partial(_grunet_kernel,
                               n_layers=L, seq_len=T, batch=B, hidden=H)
    y, hT = pl.pallas_call(
        kernel,
        out_shape=(jax.ShapeDtypeStruct((B, O), jnp.float32),
                   jax.ShapeDtypeStruct((L, B, H), jnp.float32)),
        in_specs=[full_spec(a) for a in inputs],
        out_specs=(pl.BlockSpec((B, O), lambda *_: (0, 0)),
                   pl.BlockSpec((L, B, H), lambda *_: (0, 0, 0))),
        scratch_shapes=[pltpu.VMEM((T * B, H), jnp.float32)],
    )(*inputs)
    return y, hT


# --------------------------------------------------------------------------------------
# Parameter init (deterministic, PyTorch-style uniform(-1/sqrt(H), 1/sqrt(H))),
# stored fused per-layer (columns r|z|n), pre-transposed, biases folded where
# PyTorch semantics allow, and packed into a handful of stacked tensors.
# --------------------------------------------------------------------------------------
def init_params(key, input_dim, hidden_dim, output_dim, n_layers):
    H = hidden_dim
    k = 1.0 / jnp.sqrt(jnp.float32(H))

    w0 = None
    w_rest, u_all, bx_all, bhn_all = [], [], [], []
    for l in range(n_layers):
        d_in = input_dim if l == 0 else H
        key, k1, k2, k3, k4 = jax.random.split(key, 5)
        wih = jax.random.uniform(k1, (3 * H, d_in), jnp.float32, -k, k)   # rows: r,z,n
        whh = jax.random.uniform(k2, (3 * H, H), jnp.float32, -k, k)
        bih = jax.random.uniform(k3, (3 * H,), jnp.float32, -k, k)
        bhh = jax.random.uniform(k4, (3 * H,), jnp.float32, -k, k)

        w_fused = wih.T                                   # (d_in, 3H), cols r|z|n
        u_fused = whh.T                                   # (H, 3H),   cols r|z|n
        bx = jnp.concatenate([bih[:2 * H] + bhh[:2 * H],  # fold b_ih+b_hh for r,z
                              bih[2 * H:]]).reshape(1, 3 * H)
        bhn = bhh[2 * H:].reshape(1, H)                   # stays inside r-multiply

        if l == 0:
            w0 = w_fused
        else:
            w_rest.append(w_fused)
        u_all.append(u_fused)
        bx_all.append(bx)
        bhn_all.append(bhn)

    key, k5, k6 = jax.random.split(key, 3)
    fc_w = jax.random.uniform(k5, (output_dim, H), jnp.float32, -k, k)
    fc_b = jax.random.uniform(k6, (output_dim,), jnp.float32, -k, k)

    if w_rest:
        w_rest_arr = jnp.stack(w_rest, axis=0)            # (L-1, H, 3H)
    else:
        w_rest_arr = jnp.zeros((1, H, 3 * H), jnp.float32)  # dummy (never read when L == 1)

    return {
        "w0": w0,                                         # (D, 3H)
        "w_rest": w_rest_arr,                             # (max(L-1,1), H, 3H)
        "u": jnp.stack(u_all, axis=0),                    # (L, H, 3H)
        "bx": jnp.stack(bx_all, axis=0),                  # (L, 1, 3H)
        "bhn": jnp.stack(bhn_all, axis=0),                # (L, 1, H)
        "fc_w": fc_w.T,                                   # (H, O)
        "fc_b": fc_b.reshape(1, -1),                      # (1, O)
    }


# --------------------------------------------------------------------------------------
# Pure-JAX reference for correctness check (same packed params / same math).
# --------------------------------------------------------------------------------------
def gru_net_reference(x, h0, params):
    B, T, D = x.shape
    L, _, H = h0.shape
    layer_in = x
    h_finals = []
    for l in range(L):
        W = params["w0"] if l == 0 else params["w_rest"][l - 1]
        U = params["u"][l]
        bx = params["bx"][l]
        bhn = params["bhn"][l]
        h = h0[l]
        outs = []
        for t in range(T):
            xt = layer_in[:, t]
            gx = xt @ W + bx
            gh = h @ U
            r = jax.nn.sigmoid(gx[:, 0:H] + gh[:, 0:H])
            z = jax.nn.sigmoid(gx[:, H:2 * H] + gh[:, H:2 * H])
            n = jnp.tanh(gx[:, 2 * H:] + r * (gh[:, 2 * H:] + bhn))
            h = (1.0 - z) * n + z * h
            outs.append(h)
        layer_in = jnp.stack(outs, axis=1)
        h_finals.append(h)
    y = jnp.maximum(layer_in[:, -1], 0.0) @ params["fc_w"] + params["fc_b"]
    return y, jnp.stack(h_finals, axis=0)


if __name__ == "__main__":
    B, T, D, H, O, L = 8, 8, 16, 32, 4, 2

    key = jax.random.PRNGKey(0)
    key, kx = jax.random.split(key)
    x = jax.random.normal(kx, (B, T, D), jnp.float32)
    h0 = jnp.zeros((L, B, H), jnp.float32)      # GRUNet.init_hidden
    params = init_params(key, D, H, O, L)

    # nn.GRU inter-layer dropout (p=0.2) is a no-op in eval mode and is not modeled.
    fwd = jax.jit(gru_net_forward)
    y, h_out = fwd(x, h0, params)
    jax.block_until_ready((y, h_out))

    y_ref, h_ref = gru_net_reference(x, h0, params)
    assert jnp.allclose(y, y_ref, atol=1e-4, rtol=1e-4), "output mismatch"
    assert jnp.allclose(h_out, h_ref, atol=1e-4, rtol=1e-4), "hidden mismatch"

    print("KERNEL_OK")
</pallas_src>

<mosaic_0001>
module attributes {stable_mosaic.version = 11 : i64} {
  func.func @_grunet_kernel(%arg0: memref<64x16xf32, #tpu.memory_space<vmem>>, %arg1: memref<2x8x32xf32, #tpu.memory_space<vmem>>, %arg2: memref<16x96xf32, #tpu.memory_space<vmem>>, %arg3: memref<1x32x96xf32, #tpu.memory_space<vmem>>, %arg4: memref<2x32x96xf32, #tpu.memory_space<vmem>>, %arg5: memref<2x1x96xf32, #tpu.memory_space<vmem>>, %arg6: memref<2x1x32xf32, #tpu.memory_space<vmem>>, %arg7: memref<32x4xf32, #tpu.memory_space<vmem>>, %arg8: memref<1x4xf32, #tpu.memory_space<vmem>>, %arg9: memref<8x4xf32, #tpu.memory_space<vmem>>, %arg10: memref<2x8x32xf32, #tpu.memory_space<vmem>>, %arg11: memref<64x32xf32, #tpu.memory_space<vmem>>) attributes {dimension_semantics = [], scalar_prefetch = 0 : i64, scratch_operands = 1 : i64, tpu.core_type = #tpu.core_type<tc>} {
    %c0 = arith.constant 0 : index
    %c0_0 = arith.constant 0 : index
    %0 = vector.load %arg0[%c0, %c0_0] : memref<64x16xf32, #tpu.memory_space<vmem>>, vector<64x16xf32>
    %c0_1 = arith.constant 0 : index
    %c0_2 = arith.constant 0 : index
    %1 = vector.load %arg2[%c0_1, %c0_2] : memref<16x96xf32, #tpu.memory_space<vmem>>, vector<16x96xf32>
    %c0_3 = arith.constant 0 : index
    %c0_4 = arith.constant 0 : index
    %c0_5 = arith.constant 0 : index
    %2 = vector.load %arg4[%c0_3, %c0_4, %c0_5] : memref<2x32x96xf32, #tpu.memory_space<vmem>>, vector<1x32x96xf32>
    %3 = vector.shape_cast %2 : vector<1x32x96xf32> to vector<32x96xf32>
    %c0_6 = arith.constant 0 : index
    %c0_7 = arith.constant 0 : index
    %c0_8 = arith.constant 0 : index
    %4 = vector.load %arg5[%c0_6, %c0_7, %c0_8] : memref<2x1x96xf32, #tpu.memory_space<vmem>>, vector<1x1x96xf32>
    %5 = vector.shape_cast %4 : vector<1x1x96xf32> to vector<1x96xf32>
    %c0_9 = arith.constant 0 : index
    %c0_10 = arith.constant 0 : index
    %c0_11 = arith.constant 0 : index
    %6 = vector.load %arg6[%c0_9, %c0_10, %c0_11] : memref<2x1x32xf32, #tpu.memory_space<vmem>>, vector<1x1x32xf32>
    %7 = vector.shape_cast %6 : vector<1x1x32xf32> to vector<1x32xf32>
    %cst = arith.constant dense<0.000000e+00> : vector<64x96xf32>
    %8 = tpu.matmul %0, %1, %cst {dimension_numbers = #tpu.dot_dimension_numbers<[1], [0], [0], [1], [0, 0, 1, 1], [], []>} : vector<64x16xf32>, vector<16x96xf32>, vector<64x96xf32> -> vector<64x96xf32>
    %9 = vector.broadcast %5 : vector<1x96xf32> to vector<64x96xf32>
    %10 = arith.addf %8, %9 : vector<64x96xf32>
    %c0_12 = arith.constant 0 : index
    %c0_13 = arith.constant 0 : index
    %c0_14 = arith.constant 0 : index
    %11 = vector.load %arg1[%c0_12, %c0_13, %c0_14] : memref<2x8x32xf32, #tpu.memory_space<vmem>>, vector<1x8x32xf32>
    %12 = vector.shape_cast %11 : vector<1x8x32xf32> to vector<8x32xf32>
    %cst_15 = arith.constant dense<0.000000e+00> : vector<8x96xf32>
    %13 = tpu.matmul %12, %3, %cst_15 {dimension_numbers = #tpu.dot_dimension_numbers<[1], [0], [0], [1], [0, 0, 1, 1], [], []>} : vector<8x32xf32>, vector<32x96xf32>, vector<8x96xf32> -> vector<8x96xf32>
    %14 = vector.extract_strided_slice %10 {offsets = [0, 0], sizes = [8, 96], strides = [1, 1]} : vector<64x96xf32> to vector<8x96xf32>
    %15 = vector.extract_strided_slice %14 {offsets = [0, 0], sizes = [8, 32], strides = [1, 1]} : vector<8x96xf32> to vector<8x32xf32>
    %16 = vector.extract_strided_slice %13 {offsets = [0, 0], sizes = [8, 32], strides = [1, 1]} : vector<8x96xf32> to vector<8x32xf32>
    %17 = arith.addf %15, %16 : vector<8x32xf32>
    %18 = arith.negf %17 : vector<8x32xf32>
    %19 = math.exp %18 : vector<8x32xf32>
    %cst_16 = arith.constant 1.000000e+00 : f32
    %20 = vector.broadcast %cst_16 : f32 to vector<8x32xf32>
    %21 = arith.addf %20, %19 : vector<8x32xf32>
    %22 = arith.divf %20, %21 : vector<8x32xf32>
    %23 = vector.extract_strided_slice %14 {offsets = [0, 32], sizes = [8, 32], strides = [1, 1]} : vector<8x96xf32> to vector<8x32xf32>
    %24 = vector.extract_strided_slice %13 {offsets = [0, 32], sizes = [8, 32], strides = [1, 1]} : vector<8x96xf32> to vector<8x32xf32>
    %25 = arith.addf %23, %24 : vector<8x32xf32>
    %26 = arith.negf %25 : vector<8x32xf32>
    %27 = math.exp %26 : vector<8x32xf32>
    %cst_17 = arith.constant 1.000000e+00 : f32
    %28 = vector.broadcast %cst_17 : f32 to vector<8x32xf32>
    %29 = arith.addf %28, %27 : vector<8x32xf32>
    %30 = arith.divf %28, %29 : vector<8x32xf32>
    %31 = vector.extract_strided_slice %14 {offsets = [0, 64], sizes = [8, 32], strides = [1, 1]} : vector<8x96xf32> to vector<8x32xf32>
    %32 = vector.extract_strided_slice %13 {offsets = [0, 64], sizes = [8, 32], strides = [1, 1]} : vector<8x96xf32> to vector<8x32xf32>
    %33 = vector.broadcast %7 : vector<1x32xf32> to vector<8x32xf32>
    %34 = arith.addf %32, %33 : vector<8x32xf32>
    %35 = arith.mulf %22, %34 : vector<8x32xf32>
    %36 = arith.addf %31, %35 : vector<8x32xf32>
    %37 = math.tanh %36 : vector<8x32xf32>
    %cst_18 = arith.constant 1.000000e+00 : f32
    %38 = vector.broadcast %cst_18 : f32 to vector<8x32xf32>
    %39 = arith.subf %38, %30 : vector<8x32xf32>
    %40 = arith.mulf %39, %37 : vector<8x32xf32>
    %41 = arith.mulf %30, %12 : vector<8x32xf32>
    %42 = arith.addf %40, %41 : vector<8x32xf32>
    %c0_19 = arith.constant 0 : index
    %c0_20 = arith.constant 0 : index
    %43 = vector.load %arg11[%c0_19, %c0_20] : memref<64x32xf32, #tpu.memory_space<vmem>>, vector<8x32xf32>
    tpu.vector_store %arg11[%c0_19, %c0_20], %42 {strides = array<i32>} : memref<64x32xf32, #tpu.memory_space<vmem>>, vector<8x32xf32>,
    %cst_21 = arith.constant dense<0.000000e+00> : vector<8x96xf32>
    %44 = tpu.matmul %42, %3, %cst_21 {dimension_numbers = #tpu.dot_dimension_numbers<[1], [0], [0], [1], [0, 0, 1, 1], [], []>} : vector<8x32xf32>, vector<32x96xf32>, vector<8x96xf32> -> vector<8x96xf32>
    %45 = vector.extract_strided_slice %10 {offsets = [8, 0], sizes = [8, 96], strides = [1, 1]} : vector<64x96xf32> to vector<8x96xf32>
    %46 = vector.extract_strided_slice %45 {offsets = [0, 0], sizes = [8, 32], strides = [1, 1]} : vector<8x96xf32> to vector<8x32xf32>
    %47 = vector.extract_strided_slice %44 {offsets = [0, 0], sizes = [8, 32], strides = [1, 1]} : vector<8x96xf32> to vector<8x32xf32>
    %48 = arith.addf %46, %47 : vector<8x32xf32>
    %49 = arith.negf %48 : vector<8x32xf32>
    %50 = math.exp %49 : vector<8x32xf32>
    %cst_22 = arith.constant 1.000000e+00 : f32
    %51 = vector.broadcast %cst_22 : f32 to vector<8x32xf32>
    %52 = arith.addf %51, %50 : vector<8x32xf32>
    %53 = arith.divf %51, %52 : vector<8x32xf32>
    %54 = vector.extract_strided_slice %45 {offsets = [0, 32], sizes = [8, 32], strides = [1, 1]} : vector<8x96xf32> to vector<8x32xf32>
    %55 = vector.extract_strided_slice %44 {offsets = [0, 32], sizes = [8, 32], strides = [1, 1]} : vector<8x96xf32> to vector<8x32xf32>
    %56 = arith.addf %54, %55 : vector<8x32xf32>
    %57 = arith.negf %56 : vector<8x32xf32>
    %58 = math.exp %57 : vector<8x32xf32>
    %cst_23 = arith.constant 1.000000e+00 : f32
    %59 = vector.broadcast %cst_23 : f32 to vector<8x32xf32>
    %60 = arith.addf %59, %58 : vector<8x32xf32>
    %61 = arith.divf %59, %60 : vector<8x32xf32>
    %62 = vector.extract_strided_slice %45 {offsets = [0, 64], sizes = [8, 32], strides = [1, 1]} : vector<8x96xf32> to vector<8x32xf32>
    %63 = vector.extract_strided_slice %44 {offsets = [0, 64], sizes = [8, 32], strides = [1, 1]} : vector<8x96xf32> to vector<8x32xf32>
    %64 = vector.broadcast %7 : vector<1x32xf32> to vector<8x32xf32>
    %65 = arith.addf %63, %64 : vector<8x32xf32>
    %66 = arith.mulf %53, %65 : vector<8x32xf32>
    %67 = arith.addf %62, %66 : vector<8x32xf32>
    %68 = math.tanh %67 : vector<8x32xf32>
    %cst_24 = arith.constant 1.000000e+00 : f32
    %69 = vector.broadcast %cst_24 : f32 to vector<8x32xf32>
    %70 = arith.subf %69, %61 : vector<8x32xf32>
    %71 = arith.mulf %70, %68 : vector<8x32xf32>
    %72 = arith.mulf %61, %42 : vector<8x32xf32>
    %73 = arith.addf %71, %72 : vector<8x32xf32>
    %c8 = arith.constant 8 : index
    %c0_25 = arith.constant 0 : index
    %74 = vector.load %arg11[%c8, %c0_25] : memref<64x32xf32, #tpu.memory_space<vmem>>, vector<8x32xf32>
    tpu.vector_store %arg11[%c8, %c0_25], %73 {strides = array<i32>} : memref<64x32xf32, #tpu.memory_space<vmem>>, vector<8x32xf32>,
    %cst_26 = arith.constant dense<0.000000e+00> : vector<8x96xf32>
    %75 = tpu.matmul %73, %3, %cst_26 {dimension_numbers = #tpu.dot_dimension_numbers<[1], [0], [0], [1], [0, 0, 1, 1], [], []>} : vector<8x32xf32>, vector<32x96xf32>, vector<8x96xf32> -> vector<8x96xf32>
    %76 = vector.extract_strided_slice %10 {offsets = [16, 0], sizes = [8, 96], strides = [1, 1]} : vector<64x96xf32> to vector<8x96xf32>
    %77 = vector.extract_strided_slice %76 {offsets = [0, 0], sizes = [8, 32], strides = [1, 1]} : vector<8x96xf32> to vector<8x32xf32>
    %78 = vector.extract_strided_slice %75 {offsets = [0, 0], sizes = [8, 32], strides = [1, 1]} : vector<8x96xf32> to vector<8x32xf32>
    %79 = arith.addf %77, %78 : vector<8x32xf32>
    %80 = arith.negf %79 : vector<8x32xf32>
    %81 = math.exp %80 : vector<8x32xf32>
    %cst_27 = arith.constant 1.000000e+00 : f32
    %82 = vector.broadcast %cst_27 : f32 to vector<8x32xf32>
    %83 = arith.addf %82, %81 : vector<8x32xf32>
    %84 = arith.divf %82, %83 : vector<8x32xf32>
    %85 = vector.extract_strided_slice %76 {offsets = [0, 32], sizes = [8, 32], strides = [1, 1]} : vector<8x96xf32> to vector<8x32xf32>
    %86 = vector.extract_strided_slice %75 {offsets = [0, 32], sizes = [8, 32], strides = [1, 1]} : vector<8x96xf32> to vector<8x32xf32>
    %87 = arith.addf %85, %86 : vector<8x32xf32>
    %88 = arith.negf %87 : vector<8x32xf32>
    %89 = math.exp %88 : vector<8x32xf32>
    %cst_28 = arith.constant 1.000000e+00 : f32
    %90 = vector.broadcast %cst_28 : f32 to vector<8x32xf32>
    %91 = arith.addf %90, %89 : vector<8x32xf32>
    %92 = arith.divf %90, %91 : vector<8x32xf32>
    %93 = vector.extract_strided_slice %76 {offsets = [0, 64], sizes = [8, 32], strides = [1, 1]} : vector<8x96xf32> to vector<8x32xf32>
    %94 = vector.extract_strided_slice %75 {offsets = [0, 64], sizes = [8, 32], strides = [1, 1]} : vector<8x96xf32> to vector<8x32xf32>
    %95 = vector.broadcast %7 : vector<1x32xf32> to vector<8x32xf32>
    %96 = arith.addf %94, %95 : vector<8x32xf32>
    %97 = arith.mulf %84, %96 : vector<8x32xf32>
    %98 = arith.addf %93, %97 : vector<8x32xf32>
    %99 = math.tanh %98 : vector<8x32xf32>
    %cst_29 = arith.constant 1.000000e+00 : f32
    %100 = vector.broadcast %cst_29 : f32 to vector<8x32xf32>
    %101 = arith.subf %100, %92 : vector<8x32xf32>
    %102 = arith.mulf %101, %99 : vector<8x32xf32>
    %103 = arith.mulf %92, %73 : vector<8x32xf32>
    %104 = arith.addf %102, %103 : vector<8x32xf32>
    %c16 = arith.constant 16 : index
    %c0_30 = arith.constant 0 : index
    %105 = vector.load %arg11[%c16, %c0_30] : memref<64x32xf32, #tpu.memory_space<vmem>>, vector<8x32xf32>
    tpu.vector_store %arg11[%c16, %c0_30], %104 {strides = array<i32>} : memref<64x32xf32, #tpu.memory_space<vmem>>, vector<8x32xf32>,
    %cst_31 = arith.constant dense<0.000000e+00> : vector<8x96xf32>
    %106 = tpu.matmul %104, %3, %cst_31 {dimension_numbers = #tpu.dot_dimension_numbers<[1], [0], [0], [1], [0, 0, 1, 1], [], []>} : vector<8x32xf32>, vector<32x96xf32>, vector<8x96xf32> -> vector<8x96xf32>
    %107 = vector.extract_strided_slice %10 {offsets = [24, 0], sizes = [8, 96], strides = [1, 1]} : vector<64x96xf32> to vector<8x96xf32>
    %108 = vector.extract_strided_slice %107 {offsets = [0, 0], sizes = [8, 32], strides = [1, 1]} : vector<8x96xf32> to vector<8x32xf32>
    %109 = vector.extract_strided_slice %106 {offsets = [0, 0], sizes = [8, 32], strides = [1, 1]} : vector<8x96xf32> to vector<8x32xf32>
    %110 = arith.addf %108, %109 : vector<8x32xf32>
    %111 = arith.negf %110 : vector<8x32xf32>
    %112 = math.exp %111 : vector<8x32xf32>
    %cst_32 = arith.constant 1.000000e+00 : f32
    %113 = vector.broadcast %cst_32 : f32 to vector<8x32xf32>
    %114 = arith.addf %113, %112 : vector<8x32xf32>
    %115 = arith.divf %113, %114 : vector<8x32xf32>
    %116 = vector.extract_strided_slice %107 {offsets = [0, 32], sizes = [8, 32], strides = [1, 1]} : vector<8x96xf32> to vector<8x32xf32>
    %117 = vector.extract_strided_slice %106 {offsets = [0, 32], sizes = [8, 32], strides = [1, 1]} : vector<8x96xf32> to vector<8x32xf32>
    %118 = arith.addf %116, %117 : vector<8x32xf32>
    %119 = arith.negf %118 : vector<8x32xf32>
    %120 = math.exp %119 : vector<8x32xf32>
    %cst_33 = arith.constant 1.000000e+00 : f32
    %121 = vector.broadcast %cst_33 : f32 to vector<8x32xf32>
    %122 = arith.addf %121, %120 : vector<8x32xf32>
    %123 = arith.divf %121, %122 : vector<8x32xf32>
    %124 = vector.extract_strided_slice %107 {offsets = [0, 64], sizes = [8, 32], strides = [1, 1]} : vector<8x96xf32> to vector<8x32xf32>
    %125 = vector.extract_strided_slice %106 {offsets = [0, 64], sizes = [8, 32], strides = [1, 1]} : vector<8x96xf32> to vector<8x32xf32>
    %126 = vector.broadcast %7 : vector<1x32xf32> to vector<8x32xf32>
    %127 = arith.addf %125, %126 : vector<8x32xf32>
    %128 = arith.mulf %115, %127 : vector<8x32xf32>
    %129 = arith.addf %124, %128 : vector<8x32xf32>
    %130 = math.tanh %129 : vector<8x32xf32>
    %cst_34 = arith.constant 1.000000e+00 : f32
    %131 = vector.broadcast %cst_34 : f32 to vector<8x32xf32>
    %132 = arith.subf %131, %123 : vector<8x32xf32>
    %133 = arith.mulf %132, %130 : vector<8x32xf32>
    %134 = arith.mulf %123, %104 : vector<8x32xf32>
    %135 = arith.addf %133, %134 : vector<8x32xf32>
    %c24 = arith.constant 24 : index
    %c0_35 = arith.constant 0 : index
    %136 = vector.load %arg11[%c24, %c0_35] : memref<64x32xf32, #tpu.memory_space<vmem>>, vector<8x32xf32>
    tpu.vector_store %arg11[%c24, %c0_35], %135 {strides = array<i32>} : memref<64x32xf32, #tpu.memory_space<vmem>>, vector<8x32xf32>,
    %cst_36 = arith.constant dense<0.000000e+00> : vector<8x96xf32>
    %137 = tpu.matmul %135, %3, %cst_36 {dimension_numbers = #tpu.dot_dimension_numbers<[1], [0], [0], [1], [0, 0, 1, 1], [], []>} : vector<8x32xf32>, vector<32x96xf32>, vector<8x96xf32> -> vector<8x96xf32>
    %138 = vector.extract_strided_slice %10 {offsets = [32, 0], sizes = [8, 96], strides = [1, 1]} : vector<64x96xf32> to vector<8x96xf32>
    %139 = vector.extract_strided_slice %138 {offsets = [0, 0], sizes = [8, 32], strides = [1, 1]} : vector<8x96xf32> to vector<8x32xf32>
    %140 = vector.extract_strided_slice %137 {offsets = [0, 0], sizes = [8, 32], strides = [1, 1]} : vector<8x96xf32> to vector<8x32xf32>
    %141 = arith.addf %139, %140 : vector<8x32xf32>
    %142 = arith.negf %141 : vector<8x32xf32>
    %143 = math.exp %142 : vector<8x32xf32>
    %cst_37 = arith.constant 1.000000e+00 : f32
    %144 = vector.broadcast %cst_37 : f32 to vector<8x32xf32>
    %145 = arith.addf %144, %143 : vector<8x32xf32>
    %146 = arith.divf %144, %145 : vector<8x32xf32>
    %147 = vector.extract_strided_slice %138 {offsets = [0, 32], sizes = [8, 32], strides = [1, 1]} : vector<8x96xf32> to vector<8x32xf32>
    %148 = vector.extract_strided_slice %137 {offsets = [0, 32], sizes = [8, 32], strides = [1, 1]} : vector<8x96xf32> to vector<8x32xf32>
    %149 = arith.addf %147, %148 : vector<8x32xf32>
    %150 = arith.negf %149 : vector<8x32xf32>
    %151 = math.exp %150 : vector<8x32xf32>
    %cst_38 = arith.constant 1.000000e+00 : f32
    %152 = vector.broadcast %cst_38 : f32 to vector<8x32xf32>
    %153 = arith.addf %152, %151 : vector<8x32xf32>
    %154 = arith.divf %152, %153 : vector<8x32xf32>
    %155 = vector.extract_strided_slice %138 {offsets = [0, 64], sizes = [8, 32], strides = [1, 1]} : vector<8x96xf32> to vector<8x32xf32>
    %156 = vector.extract_strided_slice %137 {offsets = [0, 64], sizes = [8, 32], strides = [1, 1]} : vector<8x96xf32> to vector<8x32xf32>
    %157 = vector.broadcast %7 : vector<1x32xf32> to vector<8x32xf32>
    %158 = arith.addf %156, %157 : vector<8x32xf32>
    %159 = arith.mulf %146, %158 : vector<8x32xf32>
    %160 = arith.addf %155, %159 : vector<8x32xf32>
    %161 = math.tanh %160 : vector<8x32xf32>
    %cst_39 = arith.constant 1.000000e+00 : f32
    %162 = vector.broadcast %cst_39 : f32 to vector<8x32xf32>
    %163 = arith.subf %162, %154 : vector<8x32xf32>
    %164 = arith.mulf %163, %161 : vector<8x32xf32>
    %165 = arith.mulf %154, %135 : vector<8x32xf32>
    %166 = arith.addf %164, %165 : vector<8x32xf32>
    %c32 = arith.constant 32 : index
    %c0_40 = arith.constant 0 : index
    %167 = vector.load %arg11[%c32, %c0_40] : memref<64x32xf32, #tpu.memory_space<vmem>>, vector<8x32xf32>
    tpu.vector_store %arg11[%c32, %c0_40], %166 {strides = array<i32>} : memref<64x32xf32, #tpu.memory_space<vmem>>, vector<8x32xf32>,
    %cst_41 = arith.constant dense<0.000000e+00> : vector<8x96xf32>
    %168 = tpu.matmul %166, %3, %cst_41 {dimension_numbers = #tpu.dot_dimension_numbers<[1], [0], [0], [1], [0, 0, 1, 1], [], []>} : vector<8x32xf32>, vector<32x96xf32>, vector<8x96xf32> -> vector<8x96xf32>
    %169 = vector.extract_strided_slice %10 {offsets = [40, 0], sizes = [8, 96], strides = [1, 1]} : vector<64x96xf32> to vector<8x96xf32>
    %170 = vector.extract_strided_slice %169 {offsets = [0, 0], sizes = [8, 32], strides = [1, 1]} : vector<8x96xf32> to vector<8x32xf32>
    %171 = vector.extract_strided_slice %168 {offsets = [0, 0], sizes = [8, 32], strides = [1, 1]} : vector<8x96xf32> to vector<8x32xf32>
    %172 = arith.addf %170, %171 : vector<8x32xf32>
    %173 = arith.negf %172 : vector<8x32xf32>
    %174 = math.exp %173 : vector<8x32xf32>
    %cst_42 = arith.constant 1.000000e+00 : f32
    %175 = vector.broadcast %cst_42 : f32 to vector<8x32xf32>
    %176 = arith.addf %175, %174 : vector<8x32xf32>
    %177 = arith.divf %175, %176 : vector<8x32xf32>
    %178 = vector.extract_strided_slice %169 {offsets = [0, 32], sizes = [8, 32], strides = [1, 1]} : vector<8x96xf32> to vector<8x32xf32>
    %179 = vector.extract_strided_slice %168 {offsets = [0, 32], sizes = [8, 32], strides = [1, 1]} : vector<8x96xf32> to vector<8x32xf32>
    %180 = arith.addf %178, %179 : vector<8x32xf32>
    %181 = arith.negf %180 : vector<8x32xf32>
    %182 = math.exp %181 : vector<8x32xf32>
    %cst_43 = arith.constant 1.000000e+00 : f32
    %183 = vector.broadcast %cst_43 : f32 to vector<8x32xf32>
    %184 = arith.addf %183, %182 : vector<8x32xf32>
    %185 = arith.divf %183, %184 : vector<8x32xf32>
    %186 = vector.extract_strided_slice %169 {offsets = [0, 64], sizes = [8, 32], strides = [1, 1]} : vector<8x96xf32> to vector<8x32xf32>
    %187 = vector.extract_strided_slice %168 {offsets = [0, 64], sizes = [8, 32], strides = [1, 1]} : vector<8x96xf32> to vector<8x32xf32>
    %188 = vector.broadcast %7 : vector<1x32xf32> to vector<8x32xf32>
    %189 = arith.addf %187, %188 : vector<8x32xf32>
    %190 = arith.mulf %177, %189 : vector<8x32xf32>
    %191 = arith.addf %186, %190 : vector<8x32xf32>
    %192 = math.tanh %191 : vector<8x32xf32>
    %cst_44 = arith.constant 1.000000e+00 : f32
    %193 = vector.broadcast %cst_44 : f32 to vector<8x32xf32>
    %194 = arith.subf %193, %185 : vector<8x32xf32>
    %195 = arith.mulf %194, %192 : vector<8x32xf32>
    %196 = arith.mulf %185, %166 : vector<8x32xf32>
    %197 = arith.addf %195, %196 : vector<8x32xf32>
    %c40 = arith.constant 40 : index
    %c0_45 = arith.constant 0 : index
    %198 = vector.load %arg11[%c40, %c0_45] : memref<64x32xf32, #tpu.memory_space<vmem>>, vector<8x32xf32>
    tpu.vector_store %arg11[%c40, %c0_45], %197 {strides = array<i32>} : memref<64x32xf32, #tpu.memory_space<vmem>>, vector<8x32xf32>,
    %cst_46 = arith.constant dense<0.000000e+00> : vector<8x96xf32>
    %199 = tpu.matmul %197, %3, %cst_46 {dimension_numbers = #tpu.dot_dimension_numbers<[1], [0], [0], [1], [0, 0, 1, 1], [], []>} : vector<8x32xf32>, vector<32x96xf32>, vector<8x96xf32> -> vector<8x96xf32>
    %200 = vector.extract_strided_slice %10 {offsets = [48, 0], sizes = [8, 96], strides = [1, 1]} : vector<64x96xf32> to vector<8x96xf32>
    %201 = vector.extract_strided_slice %200 {offsets = [0, 0], sizes = [8, 32], strides = [1, 1]} : vector<8x96xf32> to vector<8x32xf32>
    %202 = vector.extract_strided_slice %199 {offsets = [0, 0], sizes = [8, 32], strides = [1, 1]} : vector<8x96xf32> to vector<8x32xf32>
    %203 = arith.addf %201, %202 : vector<8x32xf32>
    %204 = arith.negf %203 : vector<8x32xf32>
    %205 = math.exp %204 : vector<8x32xf32>
    %cst_47 = arith.constant 1.000000e+00 : f32
    %206 = vector.broadcast %cst_47 : f32 to vector<8x32xf32>
    %207 = arith.addf %206, %205 : vector<8x32xf32>
    %208 = arith.divf %206, %207 : vector<8x32xf32>
    %209 = vector.extract_strided_slice %200 {offsets = [0, 32], sizes = [8, 32], strides = [1, 1]} : vector<8x96xf32> to vector<8x32xf32>
    %210 = vector.extract_strided_slice %199 {offsets = [0, 32], sizes = [8, 32], strides = [1, 1]} : vector<8x96xf32> to vector<8x32xf32>
    %211 = arith.addf %209, %210 : vector<8x32xf32>
    %212 = arith.negf %211 : vector<8x32xf32>
    %213 = math.exp %212 : vector<8x32xf32>
    %cst_48 = arith.constant 1.000000e+00 : f32
    %214 = vector.broadcast %cst_48 : f32 to vector<8x32xf32>
    %215 = arith.addf %214, %213 : vector<8x32xf32>
    %216 = arith.divf %214, %215 : vector<8x32xf32>
    %217 = vector.extract_strided_slice %200 {offsets = [0, 64], sizes = [8, 32], strides = [1, 1]} : vector<8x96xf32> to vector<8x32xf32>
    %218 = vector.extract_strided_slice %199 {offsets = [0, 64], sizes = [8, 32], strides = [1, 1]} : vector<8x96xf32> to vector<8x32xf32>
    %219 = vector.broadcast %7 : vector<1x32xf32> to vector<8x32xf32>
    %220 = arith.addf %218, %219 : vector<8x32xf32>
    %221 = arith.mulf %208, %220 : vector<8x32xf32>
    %222 = arith.addf %217, %221 : vector<8x32xf32>
    %223 = math.tanh %222 : vector<8x32xf32>
    %cst_49 = arith.constant 1.000000e+00 : f32
    %224 = vector.broadcast %cst_49 : f32 to vector<8x32xf32>
    %225 = arith.subf %224, %216 : vector<8x32xf32>
    %226 = arith.mulf %225, %223 : vector<8x32xf32>
    %227 = arith.mulf %216, %197 : vector<8x32xf32>
    %228 = arith.addf %226, %227 : vector<8x32xf32>
    %c48 = arith.constant 48 : index
    %c0_50 = arith.constant 0 : index
    %229 = vector.load %arg11[%c48, %c0_50] : memref<64x32xf32, #tpu.memory_space<vmem>>, vector<8x32xf32>
    tpu.vector_store %arg11[%c48, %c0_50], %228 {strides = array<i32>} : memref<64x32xf32, #tpu.memory_space<vmem>>, vector<8x32xf32>,
    %cst_51 = arith.constant dense<0.000000e+00> : vector<8x96xf32>
    %230 = tpu.matmul %228, %3, %cst_51 {dimension_numbers = #tpu.dot_dimension_numbers<[1], [0], [0], [1], [0, 0, 1, 1], [], []>} : vector<8x32xf32>, vector<32x96xf32>, vector<8x96xf32> -> vector<8x96xf32>
    %231 = vector.extract_strided_slice %10 {offsets = [56, 0], sizes = [8, 96], strides = [1, 1]} : vector<64x96xf32> to vector<8x96xf32>
    %232 = vector.extract_strided_slice %231 {offsets = [0, 0], sizes = [8, 32], strides = [1, 1]} : vector<8x96xf32> to vector<8x32xf32>
    %233 = vector.extract_strided_slice %230 {offsets = [0, 0], sizes = [8, 32], strides = [1, 1]} : vector<8x96xf32> to vector<8x32xf32>
    %234 = arith.addf %232, %233 : vector<8x32xf32>
    %235 = arith.negf %234 : vector<8x32xf32>
    %236 = math.exp %235 : vector<8x32xf32>
    %cst_52 = arith.constant 1.000000e+00 : f32
    %237 = vector.broadcast %cst_52 : f32 to vector<8x32xf32>
    %238 = arith.addf %237, %236 : vector<8x32xf32>
    %239 = arith.divf %237, %238 : vector<8x32xf32>
    %240 = vector.extract_strided_slice %231 {offsets = [0, 32], sizes = [8, 32], strides = [1, 1]} : vector<8x96xf32> to vector<8x32xf32>
    %241 = vector.extract_strided_slice %230 {offsets = [0, 32], sizes = [8, 32], strides = [1, 1]} : vector<8x96xf32> to vector<8x32xf32>
    %242 = arith.addf %240, %241 : vector<8x32xf32>
    %243 = arith.negf %242 : vector<8x32xf32>
    %244 = math.exp %243 : vector<8x32xf32>
    %cst_53 = arith.constant 1.000000e+00 : f32
    %245 = vector.broadcast %cst_53 : f32 to vector<8x32xf32>
    %246 = arith.addf %245, %244 : vector<8x32xf32>
    %247 = arith.divf %245, %246 : vector<8x32xf32>
    %248 = vector.extract_strided_slice %231 {offsets = [0, 64], sizes = [8, 32], strides = [1, 1]} : vector<8x96xf32> to vector<8x32xf32>
    %249 = vector.extract_strided_slice %230 {offsets = [0, 64], sizes = [8, 32], strides = [1, 1]} : vector<8x96xf32> to vector<8x32xf32>
    %250 = vector.broadcast %7 : vector<1x32xf32> to vector<8x32xf32>
    %251 = arith.addf %249, %250 : vector<8x32xf32>
    %252 = arith.mulf %239, %251 : vector<8x32xf32>
    %253 = arith.addf %248, %252 : vector<8x32xf32>
    %254 = math.tanh %253 : vector<8x32xf32>
    %cst_54 = arith.constant 1.000000e+00 : f32
    %255 = vector.broadcast %cst_54 : f32 to vector<8x32xf32>
    %256 = arith.subf %255, %247 : vector<8x32xf32>
    %257 = arith.mulf %256, %254 : vector<8x32xf32>
    %258 = arith.mulf %247, %228 : vector<8x32xf32>
    %259 = arith.addf %257, %258 : vector<8x32xf32>
    %c56 = arith.constant 56 : index
    %c0_55 = arith.constant 0 : index
    %260 = vector.load %arg11[%c56, %c0_55] : memref<64x32xf32, #tpu.memory_space<vmem>>, vector<8x32xf32>
    tpu.vector_store %arg11[%c56, %c0_55], %259 {strides = array<i32>} : memref<64x32xf32, #tpu.memory_space<vmem>>, vector<8x32xf32>,
    %c0_56 = arith.constant 0 : index
    %c0_57 = arith.constant 0 : index
    %c0_58 = arith.constant 0 : index
    %261 = vector.load %arg10[%c0_56, %c0_57, %c0_58] : memref<2x8x32xf32, #tpu.memory_space<vmem>>, vector<1x8x32xf32>
    %262 = vector.shape_cast %261 : vector<1x8x32xf32> to vector<8x32xf32>
    %263 = vector.shape_cast %259 : vector<8x32xf32> to vector<1x8x32xf32>
    tpu.vector_store %arg10[%c0_56, %c0_57, %c0_58], %263 {strides = array<i32>} : memref<2x8x32xf32, #tpu.memory_space<vmem>>, vector<1x8x32xf32>,
    %c0_59 = arith.constant 0 : index
    %c0_60 = arith.constant 0 : index
    %264 = vector.load %arg11[%c0_59, %c0_60] : memref<64x32xf32, #tpu.memory_space<vmem>>, vector<64x32xf32>
    %c0_61 = arith.constant 0 : index
    %c0_62 = arith.constant 0 : index
    %c0_63 = arith.constant 0 : index
    %265 = vector.load %arg3[%c0_61, %c0_62, %c0_63] : memref<1x32x96xf32, #tpu.memory_space<vmem>>, vector<1x32x96xf32>
    %266 = vector.shape_cast %265 : vector<1x32x96xf32> to vector<32x96xf32>
    %c1 = arith.constant 1 : index
    %c0_64 = arith.constant 0 : index
    %c0_65 = arith.constant 0 : index
    %267 = vector.load %arg4[%c1, %c0_64, %c0_65] : memref<2x32x96xf32, #tpu.memory_space<vmem>>, vector<1x32x96xf32>
    %268 = vector.shape_cast %267 : vector<1x32x96xf32> to vector<32x96xf32>
    %c1_66 = arith.constant 1 : index
    %c0_67 = arith.constant 0 : index
    %c0_68 = arith.constant 0 : index
    %269 = vector.load %arg5[%c1_66, %c0_67, %c0_68] : memref<2x1x96xf32, #tpu.memory_space<vmem>>, vector<1x1x96xf32>
    %270 = vector.shape_cast %269 : vector<1x1x96xf32> to vector<1x96xf32>
    %c1_69 = arith.constant 1 : index
    %c0_70 = arith.constant 0 : index
    %c0_71 = arith.constant 0 : index
    %271 = vector.load %arg6[%c1_69, %c0_70, %c0_71] : memref<2x1x32xf32, #tpu.memory_space<vmem>>, vector<1x1x32xf32>
    %272 = vector.shape_cast %271 : vector<1x1x32xf32> to vector<1x32xf32>
    %cst_72 = arith.constant dense<0.000000e+00> : vector<64x96xf32>
    %273 = tpu.matmul %264, %266, %cst_72 {dimension_numbers = #tpu.dot_dimension_numbers<[1], [0], [0], [1], [0, 0, 1, 1], [], []>} : vector<64x32xf32>, vector<32x96xf32>, vector<64x96xf32> -> vector<64x96xf32>
    %274 = vector.broadcast %270 : vector<1x96xf32> to vector<64x96xf32>
    %275 = arith.addf %273, %274 : vector<64x96xf32>
    %c1_73 = arith.constant 1 : index
    %c0_74 = arith.constant 0 : index
    %c0_75 = arith.constant 0 : index
    %276 = vector.load %arg1[%c1_73, %c0_74, %c0_75] : memref<2x8x32xf32, #tpu.memory_space<vmem>>, vector<1x8x32xf32>
    %277 = vector.shape_cast %276 : vector<1x8x32xf32> to vector<8x32xf32>
    %cst_76 = arith.constant dense<0.000000e+00> : vector<8x96xf32>
    %278 = tpu.matmul %277, %268, %cst_76 {dimension_numbers = #tpu.dot_dimension_numbers<[1], [0], [0], [1], [0, 0, 1, 1], [], []>} : vector<8x32xf32>, vector<32x96xf32>, vector<8x96xf32> -> vector<8x96xf32>
    %279 = vector.extract_strided_slice %275 {offsets = [0, 0], sizes = [8, 96], strides = [1, 1]} : vector<64x96xf32> to vector<8x96xf32>
    %280 = vector.extract_strided_slice %279 {offsets = [0, 0], sizes = [8, 32], strides = [1, 1]} : vector<8x96xf32> to vector<8x32xf32>
    %281 = vector.extract_strided_slice %278 {offsets = [0, 0], sizes = [8, 32], strides = [1, 1]} : vector<8x96xf32> to vector<8x32xf32>
    %282 = arith.addf %280, %281 : vector<8x32xf32>
    %283 = arith.negf %282 : vector<8x32xf32>
    %284 = math.exp %283 : vector<8x32xf32>
    %cst_77 = arith.constant 1.000000e+00 : f32
    %285 = vector.broadcast %cst_77 : f32 to vector<8x32xf32>
    %286 = arith.addf %285, %284 : vector<8x32xf32>
    %287 = arith.divf %285, %286 : vector<8x32xf32>
    %288 = vector.extract_strided_slice %279 {offsets = [0, 32], sizes = [8, 32], strides = [1, 1]} : vector<8x96xf32> to vector<8x32xf32>
    %289 = vector.extract_strided_slice %278 {offsets = [0, 32], sizes = [8, 32], strides = [1, 1]} : vector<8x96xf32> to vector<8x32xf32>
    %290 = arith.addf %288, %289 : vector<8x32xf32>
    %291 = arith.negf %290 : vector<8x32xf32>
    %292 = math.exp %291 : vector<8x32xf32>
    %cst_78 = arith.constant 1.000000e+00 : f32
    %293 = vector.broadcast %cst_78 : f32 to vector<8x32xf32>
    %294 = arith.addf %293, %292 : vector<8x32xf32>
    %295 = arith.divf %293, %294 : vector<8x32xf32>
    %296 = vector.extract_strided_slice %279 {offsets = [0, 64], sizes = [8, 32], strides = [1, 1]} : vector<8x96xf32> to vector<8x32xf32>
    %297 = vector.extract_strided_slice %278 {offsets = [0, 64], sizes = [8, 32], strides = [1, 1]} : vector<8x96xf32> to vector<8x32xf32>
    %298 = vector.broadcast %272 : vector<1x32xf32> to vector<8x32xf32>
    %299 = arith.addf %297, %298 : vector<8x32xf32>
    %300 = arith.mulf %287, %299 : vector<8x32xf32>
    %301 = arith.addf %296, %300 : vector<8x32xf32>
    %302 = math.tanh %301 : vector<8x32xf32>
    %cst_79 = arith.constant 1.000000e+00 : f32
    %303 = vector.broadcast %cst_79 : f32 to vector<8x32xf32>
    %304 = arith.subf %303, %295 : vector<8x32xf32>
    %305 = arith.mulf %304, %302 : vector<8x32xf32>
    %306 = arith.mulf %295, %277 : vector<8x32xf32>
    %307 = arith.addf %305, %306 : vector<8x32xf32>
    %cst_80 = arith.constant dense<0.000000e+00> : vector<8x96xf32>
    %308 = tpu.matmul %307, %268, %cst_80 {dimension_numbers = #tpu.dot_dimension_numbers<[1], [0], [0], [1], [0, 0, 1, 1], [], []>} : vector<8x32xf32>, vector<32x96xf32>, vector<8x96xf32> -> vector<8x96xf32>
    %309 = vector.extract_strided_slice %275 {offsets = [8, 0], sizes = [8, 96], strides = [1, 1]} : vector<64x96xf32> to vector<8x96xf32>
    %310 = vector.extract_strided_slice %309 {offsets = [0, 0], sizes = [8, 32], strides = [1, 1]} : vector<8x96xf32> to vector<8x32xf32>
    %311 = vector.extract_strided_slice %308 {offsets = [0, 0], sizes = [8, 32], strides = [1, 1]} : vector<8x96xf32> to vector<8x32xf32>
    %312 = arith.addf %310, %311 : vector<8x32xf32>
    %313 = arith.negf %312 : vector<8x32xf32>
    %314 = math.exp %313 : vector<8x32xf32>
    %cst_81 = arith.constant 1.000000e+00 : f32
    %315 = vector.broadcast %cst_81 : f32 to vector<8x32xf32>
    %316 = arith.addf %315, %314 : vector<8x32xf32>
    %317 = arith.divf %315, %316 : vector<8x32xf32>
    %318 = vector.extract_strided_slice %309 {offsets = [0, 32], sizes = [8, 32], strides = [1, 1]} : vector<8x96xf32> to vector<8x32xf32>
    %319 = vector.extract_strided_slice %308 {offsets = [0, 32], sizes = [8, 32], strides = [1, 1]} : vector<8x96xf32> to vector<8x32xf32>
    %320 = arith.addf %318, %319 : vector<8x32xf32>
    %321 = arith.negf %320 : vector<8x32xf32>
    %322 = math.exp %321 : vector<8x32xf32>
    %cst_82 = arith.constant 1.000000e+00 : f32
    %323 = vector.broadcast %cst_82 : f32 to vector<8x32xf32>
    %324 = arith.addf %323, %322 : vector<8x32xf32>
    %325 = arith.divf %323, %324 : vector<8x32xf32>
    %326 = vector.extract_strided_slice %309 {offsets = [0, 64], sizes = [8, 32], strides = [1, 1]} : vector<8x96xf32> to vector<8x32xf32>
    %327 = vector.extract_strided_slice %308 {offsets = [0, 64], sizes = [8, 32], strides = [1, 1]} : vector<8x96xf32> to vector<8x32xf32>
    %328 = vector.broadcast %272 : vector<1x32xf32> to vector<8x32xf32>
    %329 = arith.addf %327, %328 : vector<8x32xf32>
    %330 = arith.mulf %317, %329 : vector<8x32xf32>
    %331 = arith.addf %326, %330 : vector<8x32xf32>
    %332 = math.tanh %331 : vector<8x32xf32>
    %cst_83 = arith.constant 1.000000e+00 : f32
    %333 = vector.broadcast %cst_83 : f32 to vector<8x32xf32>
    %334 = arith.subf %333, %325 : vector<8x32xf32>
    %335 = arith.mulf %334, %332 : vector<8x32xf32>
    %336 = arith.mulf %325, %307 : vector<8x32xf32>
    %337 = arith.addf %335, %336 : vector<8x32xf32>
    %cst_84 = arith.constant dense<0.000000e+00> : vector<8x96xf32>
    %338 = tpu.matmul %337, %268, %cst_84 {dimension_numbers = #tpu.dot_dimension_numbers<[1], [0], [0], [1], [0, 0, 1, 1], [], []>} : vector<8x32xf32>, vector<32x96xf32>, vector<8x96xf32> -> vector<8x96xf32>
    %339 = vector.extract_strided_slice %275 {offsets = [16, 0], sizes = [8, 96], strides = [1, 1]} : vector<64x96xf32> to vector<8x96xf32>
    %340 = vector.extract_strided_slice %339 {offsets = [0, 0], sizes = [8, 32], strides = [1, 1]} : vector<8x96xf32> to vector<8x32xf32>
    %341 = vector.extract_strided_slice %338 {offsets = [0, 0], sizes = [8, 32], strides = [1, 1]} : vector<8x96xf32> to vector<8x32xf32>
    %342 = arith.addf %340, %341 : vector<8x32xf32>
    %343 = arith.negf %342 : vector<8x32xf32>
    %344 = math.exp %343 : vector<8x32xf32>
    %cst_85 = arith.constant 1.000000e+00 : f32
    %345 = vector.broadcast %cst_85 : f32 to vector<8x32xf32>
    %346 = arith.addf %345, %344 : vector<8x32xf32>
    %347 = arith.divf %345, %346 : vector<8x32xf32>
    %348 = vector.extract_strided_slice %339 {offsets = [0, 32], sizes = [8, 32], strides = [1, 1]} : vector<8x96xf32> to vector<8x32xf32>
    %349 = vector.extract_strided_slice %338 {offsets = [0, 32], sizes = [8, 32], strides = [1, 1]} : vector<8x96xf32> to vector<8x32xf32>
    %350 = arith.addf %348, %349 : vector<8x32xf32>
    %351 = arith.negf %350 : vector<8x32xf32>
    %352 = math.exp %351 : vector<8x32xf32>
    %cst_86 = arith.constant 1.000000e+00 : f32
    %353 = vector.broadcast %cst_86 : f32 to vector<8x32xf32>
    %354 = arith.addf %353, %352 : vector<8x32xf32>
    %355 = arith.divf %353, %354 : vector<8x32xf32>
    %356 = vector.extract_strided_slice %339 {offsets = [0, 64], sizes = [8, 32], strides = [1, 1]} : vector<8x96xf32> to vector<8x32xf32>
    %357 = vector.extract_strided_slice %338 {offsets = [0, 64], sizes = [8, 32], strides = [1, 1]} : vector<8x96xf32> to vector<8x32xf32>
    %358 = vector.broadcast %272 : vector<1x32xf32> to vector<8x32xf32>
    %359 = arith.addf %357, %358 : vector<8x32xf32>
    %360 = arith.mulf %347, %359 : vector<8x32xf32>
    %361 = arith.addf %356, %360 : vector<8x32xf32>
    %362 = math.tanh %361 : vector<8x32xf32>
    %cst_87 = arith.constant 1.000000e+00 : f32
    %363 = vector.broadcast %cst_87 : f32 to vector<8x32xf32>
    %364 = arith.subf %363, %355 : vector<8x32xf32>
    %365 = arith.mulf %364, %362 : vector<8x32xf32>
    %366 = arith.mulf %355, %337 : vector<8x32xf32>
    %367 = arith.addf %365, %366 : vector<8x32xf32>
    %cst_88 = arith.constant dense<0.000000e+00> : vector<8x96xf32>
    %368 = tpu.matmul %367, %268, %cst_88 {dimension_numbers = #tpu.dot_dimension_numbers<[1], [0], [0], [1], [0, 0, 1, 1], [], []>} : vector<8x32xf32>, vector<32x96xf32>, vector<8x96xf32> -> vector<8x96xf32>
    %369 = vector.extract_strided_slice %275 {offsets = [24, 0], sizes = [8, 96], strides = [1, 1]} : vector<64x96xf32> to vector<8x96xf32>
    %370 = vector.extract_strided_slice %369 {offsets = [0, 0], sizes = [8, 32], strides = [1, 1]} : vector<8x96xf32> to vector<8x32xf32>
    %371 = vector.extract_strided_slice %368 {offsets = [0, 0], sizes = [8, 32], strides = [1, 1]} : vector<8x96xf32> to vector<8x32xf32>
    %372 = arith.addf %370, %371 : vector<8x32xf32>
    %373 = arith.negf %372 : vector<8x32xf32>
    %374 = math.exp %373 : vector<8x32xf32>
    %cst_89 = arith.constant 1.000000e+00 : f32
    %375 = vector.broadcast %cst_89 : f32 to vector<8x32xf32>
    %376 = arith.addf %375, %374 : vector<8x32xf32>
    %377 = arith.divf %375, %376 : vector<8x32xf32>
    %378 = vector.extract_strided_slice %369 {offsets = [0, 32], sizes = [8, 32], strides = [1, 1]} : vector<8x96xf32> to vector<8x32xf32>
    %379 = vector.extract_strided_slice %368 {offsets = [0, 32], sizes = [8, 32], strides = [1, 1]} : vector<8x96xf32> to vector<8x32xf32>
    %380 = arith.addf %378, %379 : vector<8x32xf32>
    %381 = arith.negf %380 : vector<8x32xf32>
    %382 = math.exp %381 : vector<8x32xf32>
    %cst_90 = arith.constant 1.000000e+00 : f32
    %383 = vector.broadcast %cst_90 : f32 to vector<8x32xf32>
    %384 = arith.addf %383, %382 : vector<8x32xf32>
    %385 = arith.divf %383, %384 : vector<8x32xf32>
    %386 = vector.extract_strided_slice %369 {offsets = [0, 64], sizes = [8, 32], strides = [1, 1]} : vector<8x96xf32> to vector<8x32xf32>
    %387 = vector.extract_strided_slice %368 {offsets = [0, 64], sizes = [8, 32], strides = [1, 1]} : vector<8x96xf32> to vector<8x32xf32>
    %388 = vector.broadcast %272 : vector<1x32xf32> to vector<8x32xf32>
    %389 = arith.addf %387, %388 : vector<8x32xf32>
    %390 = arith.mulf %377, %389 : vector<8x32xf32>
    %391 = arith.addf %386, %390 : vector<8x32xf32>
    %392 = math.tanh %391 : vector<8x32xf32>
    %cst_91 = arith.constant 1.000000e+00 : f32
    %393 = vector.broadcast %cst_91 : f32 to vector<8x32xf32>
    %394 = arith.subf %393, %385 : vector<8x32xf32>
    %395 = arith.mulf %394, %392 : vector<8x32xf32>
    %396 = arith.mulf %385, %367 : vector<8x32xf32>
    %397 = arith.addf %395, %396 : vector<8x32xf32>
    %cst_92 = arith.constant dense<0.000000e+00> : vector<8x96xf32>
    %398 = tpu.matmul %397, %268, %cst_92 {dimension_numbers = #tpu.dot_dimension_numbers<[1], [0], [0], [1], [0, 0, 1, 1], [], []>} : vector<8x32xf32>, vector<32x96xf32>, vector<8x96xf32> -> vector<8x96xf32>
    %399 = vector.extract_strided_slice %275 {offsets = [32, 0], sizes = [8, 96], strides = [1, 1]} : vector<64x96xf32> to vector<8x96xf32>
    %400 = vector.extract_strided_slice %399 {offsets = [0, 0], sizes = [8, 32], strides = [1, 1]} : vector<8x96xf32> to vector<8x32xf32>
    %401 = vector.extract_strided_slice %398 {offsets = [0, 0], sizes = [8, 32], strides = [1, 1]} : vector<8x96xf32> to vector<8x32xf32>
    %402 = arith.addf %400, %401 : vector<8x32xf32>
    %403 = arith.negf %402 : vector<8x32xf32>
    %404 = math.exp %403 : vector<8x32xf32>
    %cst_93 = arith.constant 1.000000e+00 : f32
    %405 = vector.broadcast %cst_93 : f32 to vector<8x32xf32>
    %406 = arith.addf %405, %404 : vector<8x32xf32>
    %407 = arith.divf %405, %406 : vector<8x32xf32>
    %408 = vector.extract_strided_slice %399 {offsets = [0, 32], sizes = [8, 32], strides = [1, 1]} : vector<8x96xf32> to vector<8x32xf32>
    %409 = vector.extract_strided_slice %398 {offsets = [0, 32], sizes = [8, 32], strides = [1, 1]} : vector<8x96xf32> to vector<8x32xf32>
    %410 = arith.addf %408, %409 : vector<8x32xf32>
    %411 = arith.negf %410 : vector<8x32xf32>
    %412 = math.exp %411 : vector<8x32xf32>
    %cst_94 = arith.constant 1.000000e+00 : f32
    %413 = vector.broadcast %cst_94 : f32 to vector<8x32xf32>
    %414 = arith.addf %413, %412 : vector<8x32xf32>
    %415 = arith.divf %413, %414 : vector<8x32xf32>
    %416 = vector.extract_strided_slice %399 {offsets = [0, 64], sizes = [8, 32], strides = [1, 1]} : vector<8x96xf32> to vector<8x32xf32>
    %417 = vector.extract_strided_slice %398 {offsets = [0, 64], sizes = [8, 32], strides = [1, 1]} : vector<8x96xf32> to vector<8x32xf32>
    %418 = vector.broadcast %272 : vector<1x32xf32> to vector<8x32xf32>
    %419 = arith.addf %417, %418 : vector<8x32xf32>
    %420 = arith.mulf %407, %419 : vector<8x32xf32>
    %421 = arith.addf %416, %420 : vector<8x32xf32>
    %422 = math.tanh %421 : vector<8x32xf32>
    %cst_95 = arith.constant 1.000000e+00 : f32
    %423 = vector.broadcast %cst_95 : f32 to vector<8x32xf32>
    %424 = arith.subf %423, %415 : vector<8x32xf32>
    %425 = arith.mulf %424, %422 : vector<8x32xf32>
    %426 = arith.mulf %415, %397 : vector<8x32xf32>
    %427 = arith.addf %425, %426 : vector<8x32xf32>
    %cst_96 = arith.constant dense<0.000000e+00> : vector<8x96xf32>
    %428 = tpu.matmul %427, %268, %cst_96 {dimension_numbers = #tpu.dot_dimension_numbers<[1], [0], [0], [1], [0, 0, 1, 1], [], []>} : vector<8x32xf32>, vector<32x96xf32>, vector<8x96xf32> -> vector<8x96xf32>
    %429 = vector.extract_strided_slice %275 {offsets = [40, 0], sizes = [8, 96], strides = [1, 1]} : vector<64x96xf32> to vector<8x96xf32>
    %430 = vector.extract_strided_slice %429 {offsets = [0, 0], sizes = [8, 32], strides = [1, 1]} : vector<8x96xf32> to vector<8x32xf32>
    %431 = vector.extract_strided_slice %428 {offsets = [0, 0], sizes = [8, 32], strides = [1, 1]} : vector<8x96xf32> to vector<8x32xf32>
    %432 = arith.addf %430, %431 : vector<8x32xf32>
    %433 = arith.negf %432 : vector<8x32xf32>
    %434 = math.exp %433 : vector<8x32xf32>
    %cst_97 = arith.constant 1.000000e+00 : f32
    %435 = vector.broadcast %cst_97 : f32 to vector<8x32xf32>
    %436 = arith.addf %435, %434 : vector<8x32xf32>
    %437 = arith.divf %435, %436 : vector<8x32xf32>
    %438 = vector.extract_strided_slice %429 {offsets = [0, 32], sizes = [8, 32], strides = [1, 1]} : vector<8x96xf32> to vector<8x32xf32>
    %439 = vector.extract_strided_slice %428 {offsets = [0, 32], sizes = [8, 32], strides = [1, 1]} : vector<8x96xf32> to vector<8x32xf32>
    %440 = arith.addf %438, %439 : vector<8x32xf32>
    %441 = arith.negf %440 : vector<8x32xf32>
    %442 = math.exp %441 : vector<8x32xf32>
    %cst_98 = arith.constant 1.000000e+00 : f32
    %443 = vector.broadcast %cst_98 : f32 to vector<8x32xf32>
    %444 = arith.addf %443, %442 : vector<8x32xf32>
    %445 = arith.divf %443, %444 : vector<8x32xf32>
    %446 = vector.extract_strided_slice %429 {offsets = [0, 64], sizes = [8, 32], strides = [1, 1]} : vector<8x96xf32> to vector<8x32xf32>
    %447 = vector.extract_strided_slice %428 {offsets = [0, 64], sizes = [8, 32], strides = [1, 1]} : vector<8x96xf32> to vector<8x32xf32>
    %448 = vector.broadcast %272 : vector<1x32xf32> to vector<8x32xf32>
    %449 = arith.addf %447, %448 : vector<8x32xf32>
    %450 = arith.mulf %437, %449 : vector<8x32xf32>
    %451 = arith.addf %446, %450 : vector<8x32xf32>
    %452 = math.tanh %451 : vector<8x32xf32>
    %cst_99 = arith.constant 1.000000e+00 : f32
    %453 = vector.broadcast %cst_99 : f32 to vector<8x32xf32>
    %454 = arith.subf %453, %445 : vector<8x32xf32>
    %455 = arith.mulf %454, %452 : vector<8x32xf32>
    %456 = arith.mulf %445, %427 : vector<8x32xf32>
    %457 = arith.addf %455, %456 : vector<8x32xf32>
    %cst_100 = arith.constant dense<0.000000e+00> : vector<8x96xf32>
    %458 = tpu.matmul %457, %268, %cst_100 {dimension_numbers = #tpu.dot_dimension_numbers<[1], [0], [0], [1], [0, 0, 1, 1], [], []>} : vector<8x32xf32>, vector<32x96xf32>, vector<8x96xf32> -> vector<8x96xf32>
    %459 = vector.extract_strided_slice %275 {offsets = [48, 0], sizes = [8, 96], strides = [1, 1]} : vector<64x96xf32> to vector<8x96xf32>
    %460 = vector.extract_strided_slice %459 {offsets = [0, 0], sizes = [8, 32], strides = [1, 1]} : vector<8x96xf32> to vector<8x32xf32>
    %461 = vector.extract_strided_slice %458 {offsets = [0, 0], sizes = [8, 32], strides = [1, 1]} : vector<8x96xf32> to vector<8x32xf32>
    %462 = arith.addf %460, %461 : vector<8x32xf32>
    %463 = arith.negf %462 : vector<8x32xf32>
    %464 = math.exp %463 : vector<8x32xf32>
    %cst_101 = arith.constant 1.000000e+00 : f32
    %465 = vector.broadcast %cst_101 : f32 to vector<8x32xf32>
    %466 = arith.addf %465, %464 : vector<8x32xf32>
    %467 = arith.divf %465, %466 : vector<8x32xf32>
    %468 = vector.extract_strided_slice %459 {offsets = [0, 32], sizes = [8, 32], strides = [1, 1]} : vector<8x96xf32> to vector<8x32xf32>
    %469 = vector.extract_strided_slice %458 {offsets = [0, 32], sizes = [8, 32], strides = [1, 1]} : vector<8x96xf32> to vector<8x32xf32>
    %470 = arith.addf %468, %469 : vector<8x32xf32>
    %471 = arith.negf %470 : vector<8x32xf32>
    %472 = math.exp %471 : vector<8x32xf32>
    %cst_102 = arith.constant 1.000000e+00 : f32
    %473 = vector.broadcast %cst_102 : f32 to vector<8x32xf32>
    %474 = arith.addf %473, %472 : vector<8x32xf32>
    %475 = arith.divf %473, %474 : vector<8x32xf32>
    %476 = vector.extract_strided_slice %459 {offsets = [0, 64], sizes = [8, 32], strides = [1, 1]} : vector<8x96xf32> to vector<8x32xf32>
    %477 = vector.extract_strided_slice %458 {offsets = [0, 64], sizes = [8, 32], strides = [1, 1]} : vector<8x96xf32> to vector<8x32xf32>
    %478 = vector.broadcast %272 : vector<1x32xf32> to vector<8x32xf32>
    %479 = arith.addf %477, %478 : vector<8x32xf32>
    %480 = arith.mulf %467, %479 : vector<8x32xf32>
    %481 = arith.addf %476, %480 : vector<8x32xf32>
    %482 = math.tanh %481 : vector<8x32xf32>
    %cst_103 = arith.constant 1.000000e+00 : f32
    %483 = vector.broadcast %cst_103 : f32 to vector<8x32xf32>
    %484 = arith.subf %483, %475 : vector<8x32xf32>
    %485 = arith.mulf %484, %482 : vector<8x32xf32>
    %486 = arith.mulf %475, %457 : vector<8x32xf32>
    %487 = arith.addf %485, %486 : vector<8x32xf32>
    %cst_104 = arith.constant dense<0.000000e+00> : vector<8x96xf32>
    %488 = tpu.matmul %487, %268, %cst_104 {dimension_numbers = #tpu.dot_dimension_numbers<[1], [0], [0], [1], [0, 0, 1, 1], [], []>} : vector<8x32xf32>, vector<32x96xf32>, vector<8x96xf32> -> vector<8x96xf32>
    %489 = vector.extract_strided_slice %275 {offsets = [56, 0], sizes = [8, 96], strides = [1, 1]} : vector<64x96xf32> to vector<8x96xf32>
    %490 = vector.extract_strided_slice %489 {offsets = [0, 0], sizes = [8, 32], strides = [1, 1]} : vector<8x96xf32> to vector<8x32xf32>
    %491 = vector.extract_strided_slice %488 {offsets = [0, 0], sizes = [8, 32], strides = [1, 1]} : vector<8x96xf32> to vector<8x32xf32>
    %492 = arith.addf %490, %491 : vector<8x32xf32>
    %493 = arith.negf %492 : vector<8x32xf32>
    %494 = math.exp %493 : vector<8x32xf32>
    %cst_105 = arith.constant 1.000000e+00 : f32
    %495 = vector.broadcast %cst_105 : f32 to vector<8x32xf32>
    %496 = arith.addf %495, %494 : vector<8x32xf32>
    %497 = arith.divf %495, %496 : vector<8x32xf32>
    %498 = vector.extract_strided_slice %489 {offsets = [0, 32], sizes = [8, 32], strides = [1, 1]} : vector<8x96xf32> to vector<8x32xf32>
    %499 = vector.extract_strided_slice %488 {offsets = [0, 32], sizes = [8, 32], strides = [1, 1]} : vector<8x96xf32> to vector<8x32xf32>
    %500 = arith.addf %498, %499 : vector<8x32xf32>
    %501 = arith.negf %500 : vector<8x32xf32>
    %502 = math.exp %501 : vector<8x32xf32>
    %cst_106 = arith.constant 1.000000e+00 : f32
    %503 = vector.broadcast %cst_106 : f32 to vector<8x32xf32>
    %504 = arith.addf %503, %502 : vector<8x32xf32>
    %505 = arith.divf %503, %504 : vector<8x32xf32>
    %506 = vector.extract_strided_slice %489 {offsets = [0, 64], sizes = [8, 32], strides = [1, 1]} : vector<8x96xf32> to vector<8x32xf32>
    %507 = vector.extract_strided_slice %488 {offsets = [0, 64], sizes = [8, 32], strides = [1, 1]} : vector<8x96xf32> to vector<8x32xf32>
    %508 = vector.broadcast %272 : vector<1x32xf32> to vector<8x32xf32>
    %509 = arith.addf %507, %508 : vector<8x32xf32>
    %510 = arith.mulf %497, %509 : vector<8x32xf32>
    %511 = arith.addf %506, %510 : vector<8x32xf32>
    %512 = math.tanh %511 : vector<8x32xf32>
    %cst_107 = arith.constant 1.000000e+00 : f32
    %513 = vector.broadcast %cst_107 : f32 to vector<8x32xf32>
    %514 = arith.subf %513, %505 : vector<8x32xf32>
    %515 = arith.mulf %514, %512 : vector<8x32xf32>
    %516 = arith.mulf %505, %487 : vector<8x32xf32>
    %517 = arith.addf %515, %516 : vector<8x32xf32>
    %c1_108 = arith.constant 1 : index
    %c0_109 = arith.constant 0 : index
    %c0_110 = arith.constant 0 : index
    %518 = vector.load %arg10[%c1_108, %c0_109, %c0_110] : memref<2x8x32xf32, #tpu.memory_space<vmem>>, vector<1x8x32xf32>
    %519 = vector.shape_cast %518 : vector<1x8x32xf32> to vector<8x32xf32>
    %520 = vector.shape_cast %517 : vector<8x32xf32> to vector<1x8x32xf32>
    tpu.vector_store %arg10[%c1_108, %c0_109, %c0_110], %520 {strides = array<i32>} : memref<2x8x32xf32, #tpu.memory_space<vmem>>, vector<1x8x32xf32>,
    %cst_111 = arith.constant 0.000000e+00 : f32
    %521 = vector.broadcast %cst_111 : f32 to vector<8x32xf32>
    %522 = arith.maximumf %517, %521 : vector<8x32xf32>
    %c0_112 = arith.constant 0 : index
    %c0_113 = arith.constant 0 : index
    %523 = vector.load %arg7[%c0_112, %c0_113] : memref<32x4xf32, #tpu.memory_space<vmem>>, vector<32x4xf32>
    %cst_114 = arith.constant dense<0.000000e+00> : vector<8x4xf32>
    %524 = tpu.matmul %522, %523, %cst_114 {dimension_numbers = #tpu.dot_dimension_numbers<[1], [0], [0], [1], [0, 0, 1, 1], [], []>} : vector<8x32xf32>, vector<32x4xf32>, vector<8x4xf32> -> vector<8x4xf32>
    %c0_115 = arith.constant 0 : index
    %c0_116 = arith.constant 0 : index
    %525 = vector.load %arg8[%c0_115, %c0_116] : memref<1x4xf32, #tpu.memory_space<vmem>>, vector<1x4xf32>
    %526 = vector.broadcast %525 : vector<1x4xf32> to vector<8x4xf32>
    %527 = arith.addf %524, %526 : vector<8x4xf32>
    %c0_117 = arith.constant 0 : index
    %c0_118 = arith.constant 0 : index
    %528 = vector.load %arg9[%c0_117, %c0_118] : memref<8x4xf32, #tpu.memory_space<vmem>>, vector<8x4xf32>
    tpu.vector_store %arg9[%c0_117, %c0_118], %527 {strides = array<i32>} : memref<8x4xf32, #tpu.memory_space<vmem>>, vector<8x4xf32>,
    return
  }
}

</mosaic_0001>

<llo_original>
// kernel: gru_net_forward.1
$region0: #{gru_net_forward.1}
  #allocation0 [shape = 'u32[]', space=smem, size = 0x4, offset = 0x4, fixed_abs, tag = 'smem constant byte address 0x4 - core index']
  #allocation1 [shape = 'u32[144,128]{1,0:T(1,128)}', space=vmem, size = 0x12000, scoped, tag = 'internal scratch']
  #allocation2 [shape = 'f32[64,32]{1,0:T(8,128)}', space=vmem, size = 0x8000, scoped, tag = 'scratch operand']
  %s0 = inlined_call_operand.vmem [shape: f32[64,16], index: 0, kind: input, shape index: {}]
  %s1 = inlined_call_operand.vmem [shape: f32[2,8,32], index: 1, kind: input, shape index: {}]
  %s2 = inlined_call_operand.vmem [shape: f32[16,96], index: 2, kind: input, shape index: {}]
  %s3 = inlined_call_operand.vmem [shape: f32[1,32,96], index: 3, kind: input, shape index: {}]
  %s4 = inlined_call_operand.vmem [shape: f32[2,32,96], index: 4, kind: input, shape index: {}]
  %s5 = inlined_call_operand.vmem [shape: f32[2,1,96], index: 5, kind: input, shape index: {}]
  %s6 = inlined_call_operand.vmem [shape: f32[2,1,32], index: 6, kind: input, shape index: {}]
  %s7 = inlined_call_operand.vmem [shape: f32[32,4], index: 7, kind: input, shape index: {}]
  %s8 = inlined_call_operand.vmem [shape: f32[1,4], index: 8, kind: input, shape index: {}]
  %s9 = inlined_call_operand.vmem [shape: f32[8,4], index: 9, kind: output, shape index: {0}]
  %s10 = inlined_call_operand.hbm [shape: f32[2,8,32], index: 10, kind: output, shape index: {1}]
  %11 = xla_tuple %s9, %s10
  %s12 = sld [smem:[#allocation0]]
  $region54: #{gru_net_forward.1} parent=0
    _
  %s14 = ssub.s32 1, %s12
  %s15 = scalar_select 0, %s14, %s12
  $region1: #{gru_net_forward.1} parent=0
    #allocation3 [shape = 'u8[8192]{0}', space=vmem, size = 0x2000, scoped, tag = 'output window, operand 1, single buffered']
    #allocation4 [shape = 's32[1]{0}', space=sflag, size = 0x4, scoped, tag = 'scoped memory for gru_net_forward.1']
    %16 = vsyncpa [#allocation4], 0
    // Predicated region
    $region2: #{gru_net_forward.1} parent=1 // pred_check
      _
    $region3: #{gru_net_forward.1} parent=1 // pred_check_branch
      %18 = sbr.rel (0) target = $region5
    $region4: #{gru_net_forward.1} parent=1 // pred_region
      _
    $region5: #{gru_net_forward.1} parent=1 // pred_fallthru
      _
    // Predicated region
    $region6: #{gru_net_forward.1} parent=1 // pred_check
      _
    $region7: #{gru_net_forward.1} parent=1 // pred_check_branch
      %20 = sbr.rel (0) target = $region9
    $region8: #{gru_net_forward.1} parent=1 // pred_region
      _
    $region9: #{gru_net_forward.1} parent=1 // pred_fallthru
      _
    // Predicated region
    $region10: #{gru_net_forward.1} parent=1 // pred_check
      _
    $region11: #{gru_net_forward.1} parent=1 // pred_check_branch
      %22 = sbr.rel (0) target = $region13
    $region12: #{gru_net_forward.1} parent=1 // pred_region
      _
    $region13: #{gru_net_forward.1} parent=1 // pred_fallthru
      _
    // Predicated region
    $region14: #{gru_net_forward.1} parent=1 // pred_check
      _
    $region15: #{gru_net_forward.1} parent=1 // pred_check_branch
      %24 = sbr.rel (0) target = $region17
    $region16: #{gru_net_forward.1} parent=1 // pred_region
      _
    $region17: #{gru_net_forward.1} parent=1 // pred_fallthru
      _
    // Predicated region
    $region18: #{gru_net_forward.1} parent=1 // pred_check
      _
    $region19: #{gru_net_forward.1} parent=1 // pred_check_branch
      %26 = sbr.rel (0) target = $region21
    $region20: #{gru_net_forward.1} parent=1 // pred_region
      _
    $region21: #{gru_net_forward.1} parent=1 // pred_fallthru
      _
    // Predicated region
    $region22: #{gru_net_forward.1} parent=1 // pred_check
      _
    $region23: #{gru_net_forward.1} parent=1 // pred_check_branch
      %28 = sbr.rel (0) target = $region25
    $region24: #{gru_net_forward.1} parent=1 // pred_region
      _
    $region25: #{gru_net_forward.1} parent=1 // pred_fallthru
      _
    // Predicated region
    $region26: #{gru_net_forward.1} parent=1 // pred_check
      _
    $region27: #{gru_net_forward.1} parent=1 // pred_check_branch
      %30 = sbr.rel (0) target = $region29
    $region28: #{gru_net_forward.1} parent=1 // pred_region
      _
    $region29: #{gru_net_forward.1} parent=1 // pred_fallthru
      _
    // Predicated region
    $region30: #{gru_net_forward.1} parent=1 // pred_check
      _
    $region31: #{gru_net_forward.1} parent=1 // pred_check_branch
      %32 = sbr.rel (0) target = $region33
    $region32: #{gru_net_forward.1} parent=1 // pred_region
      _
    $region33: #{gru_net_forward.1} parent=1 // pred_fallthru
      _
    // Predicated region
    $region34: #{gru_net_forward.1} parent=1 // pred_check
      _
    $region35: #{gru_net_forward.1} parent=1 // pred_check_branch
      %34 = sbr.rel (0) target = $region37
    $region36: #{gru_net_forward.1} parent=1 // pred_region
      _
    $region37: #{gru_net_forward.1} parent=1 // pred_fallthru
      _
    %v35 = vld [vmem:[%s0] sm:$0xff]
    %v36 = vld [vmem:[%s0 + $0x8] sm:$0xff]
    %v37 = vld [vmem:[%s0 + $0x10] sm:$0xff]
    %v38 = vld [vmem:[%s0 + $0x18] sm:$0xff]
    %v39 = vld [vmem:[%s0 + $0x20] sm:$0xff]
    %v40 = vld [vmem:[%s0 + $0x28] sm:$0xff]
    %v41 = vld [vmem:[%s0 + $0x30] sm:$0xff]
    %v42 = vld [vmem:[%s0 + $0x38] sm:$0xff]
    %v43 = vld [vmem:[%s2] sm:$0xff]
    %v44 = vld [vmem:[%s2 + $0x8] sm:$0xff]
    %v45 = vld [vmem:[%s4] sm:$0xff]
    %v46 = vld [vmem:[%s4 + $0x8] sm:$0xff]
    %v47 = vld [vmem:[%s4 + $0x10] sm:$0xff]
    %v48 = vld [vmem:[%s4 + $0x18] sm:$0xff]
    %v49 = vld [vmem:[%s5] sm:$0x1]
    %v50 = vld [vmem:[%s6] sm:$0x1]
    %v52 = vlaneseq
    %v53 = vshrl.u32 %v52, 7
    %v54 = vsub.s32 0, %v53
    %v55 = vrot.slane %v49, %v54
    %vm57 = vcmask 130048
    %v59 = vsel %vm57, %v35, 0
    %v62 = vsel %vm57, %v36, 0
    %v65 = vsel %vm57, %v37, 0
    %v68 = vsel %vm57, %v38, 0
    %v71 = vsel %vm57, %v39, 0
    %v74 = vsel %vm57, %v40, 0
    %v77 = vsel %vm57, %v41, 0
    %v80 = vsel %vm57, %v42, 0
    %82 = vmatprep.subr.mxu0 0.0
    %83 = vmatpush1.msra.mxu0 %v43
    %84 = vmatprep.subr.mxu0 0.0
    %85 = vmatpush1.msra.mxu0 %v44
    %86 = vmatprep.subr.mxu0 0.0
    %87 = vmatpush1.msra.mxu0 0.0
    %88 = vmatprep.subr.mxu0 0.0
    %89 = vmatpush1.msra.mxu0 0.0
    %90 = vmatprep.subr.mxu0 0.0
    %91 = vmatpush1.msra.mxu0 0.0
    %92 = vmatprep.subr.mxu0 0.0
    %93 = vmatpush1.msra.mxu0 0.0
    %94 = vmatprep.subr.mxu0 0.0
    %95 = vmatpush1.msra.mxu0 0.0
    %96 = vmatprep.subr.mxu0 0.0
    %97 = vmatpush1.msra.mxu0 0.0
    %98 = vmatprep.subr.mxu0 0.0
    %99 = vmatpush1.msra.mxu0 0.0
    %100 = vmatprep.subr.mxu0 0.0
    %101 = vmatpush1.msra.mxu0 0.0
    %102 = vmatprep.subr.mxu0 0.0
    %103 = vmatpush1.msra.mxu0 0.0
    %104 = vmatprep.subr.mxu0 0.0
    %105 = vmatpush1.msra.mxu0 0.0
    %106 = vmatprep.subr.mxu0 0.0
    %107 = vmatpush1.msra.mxu0 0.0
    %108 = vmatprep.subr.mxu0 0.0
    %109 = vmatpush1.msra.mxu0 0.0
    %110 = vmatprep.subr.mxu0 0.0
    %111 = vmatpush1.msra.mxu0 0.0
    %112 = vmatprep.subr.mxu0 0.0
    %113 = vmatpush1.msra.mxu0 0.0
    %114 = vmatprep.subr.mxu0 0.0
    %115 = vmatpush1.msra.mxu0 0.0
    %116 = vmatprep.subr.mxu0 0.0
    %117 = vmatpush1.msra.mxu0 0.0
    %118 = vmatprep.subr.mxu0 0.0
    %119 = vmatpush1.msra.mxu0 0.0
    %120 = vmatprep.subr.mxu0 0.0
    %121 = vmatpush1.msra.mxu0 0.0
    %122 = vmatprep.subr.mxu0 0.0
    %123 = vmatpush1.msra.mxu0 0.0
    %124 = vmatprep.subr.mxu0 0.0
    %125 = vmatpush1.msra.mxu0 0.0
    %126 = vmatprep.subr.mxu0 0.0
    %127 = vmatpush1.msra.mxu0 0.0
    %128 = vmatprep.subr.mxu0 0.0
    %129 = vmatpush1.msra.mxu0 0.0
    %130 = vmatprep.subr.mxu0 0.0
    %131 = vmatpush1.msra.mxu0 0.0
    %132 = vmatprep.subr.mxu0 0.0
    %133 = vmatpush1.msra.mxu0 0.0
    %134 = vmatprep.subr.mxu0 0.0
    %135 = vmatpush1.msra.mxu0 0.0
    %136 = vmatprep.subr.mxu0 0.0
    %137 = vmatpush1.msra.mxu0 0.0
    %138 = vmatprep.subr.mxu0 0.0
    %139 = vmatpush1.msra.mxu0 0.0
    %140 = vmatprep.subr.mxu0 0.0
    %141 = vmatpush1.msra.mxu0 0.0
    %142 = vmatprep.subr.mxu0 0.0
    %143 = vmatpush1.msra.mxu0 0.0
    %144 = vmatprep.subr.mxu0 0.0
    %145 = vmatpush1.msra.mxu0 0.0
    %146 = vmatprep.mubr.f32.mxu0 0.0
    %147 = vmatmul.mubr.f32.gmra.mrb[0].mxu0 %v59
    %v148 = vpop.f32.mrb[0].mxu0
    %v149 = vadd.f32 %v55, %v148
    %v150 = vpop.f32.mrb[0].mxu0
    %151 = vmatprep.mubr.f32.mxu0 0.0
    %152 = vmatmul.mubr.f32.gmra.mrb[0].mxu0 %v62
    %v153 = vpop.f32.mrb[0].mxu0
    %v154 = vadd.f32 %v55, %v153
    %v155 = vpop.f32.mrb[0].mxu0
    %156 = vmatprep.mubr.f32.mxu0 0.0
    %157 = vmatmul.mubr.f32.gmra.mrb[0].mxu0 %v65
    %v158 = vpop.f32.mrb[0].mxu0
    %v159 = vadd.f32 %v55, %v158
    %v160 = vpop.f32.mrb[0].mxu0
    %161 = vmatprep.mubr.f32.mxu0 0.0
    %162 = vmatmul.mubr.f32.gmra.mrb[0].mxu0 %v68
    %v163 = vpop.f32.mrb[0].mxu0
    %v164 = vadd.f32 %v55, %v163
    %v165 = vpop.f32.mrb[0].mxu0
    %166 = vmatprep.mubr.f32.mxu0 0.0
    %167 = vmatmul.mubr.f32.gmra.mrb[0].mxu0 %v71
    %v168 = vpop.f32.mrb[0].mxu0
    %v169 = vadd.f32 %v55, %v168
    %v170 = vpop.f32.mrb[0].mxu0
    %171 = vmatprep.mubr.f32.mxu0 0.0
    %172 = vmatmul.mubr.f32.gmra.mrb[0].mxu0 %v74
    %v173 = vpop.f32.mrb[0].mxu0
    %v174 = vadd.f32 %v55, %v173
    %v175 = vpop.f32.mrb[0].mxu0
    %176 = vmatprep.mubr.f32.mxu0 0.0
    %177 = vmatmul.mubr.f32.gmra.mrb[0].mxu0 %v77
    %v178 = vpop.f32.mrb[0].mxu0
    %v179 = vadd.f32 %v55, %v178
    %v180 = vpop.f32.mrb[0].mxu0
    %181 = vmatprep.mubr.f32.mxu0 0.0
    %182 = vmatmul.mubr.f32.gmra.mrb[0].mxu0 %v80
    %v183 = vpop.f32.mrb[0].mxu0
    %v184 = vadd.f32 %v55, %v183
    %v185 = vpop.f32.mrb[0].mxu0
    %186 = vdwg.mxu0
    %v187 = vld [vmem:[%s1] sm:$0xff]
    %vm188 = vcmask 261120
    %v190 = vsel %vm188, %v187, 0
    %192 = vmatprep.subr.mxu0 0.0
    %193 = vmatpush1.msra.mxu0 %v45
    %194 = vmatprep.subr.mxu0 0.0
    %195 = vmatpush1.msra.mxu0 %v46
    %196 = vmatprep.subr.mxu0 0.0
    %197 = vmatpush1.msra.mxu0 %v47
    %198 = vmatprep.subr.mxu0 0.0
    %199 = vmatpush1.msra.mxu0 %v48
    %200 = vmatprep.subr.mxu0 0.0
    %201 = vmatpush1.msra.mxu0 0.0
    %202 = vmatprep.subr.mxu0 0.0
    %203 = vmatpush1.msra.mxu0 0.0
    %204 = vmatprep.subr.mxu0 0.0
    %205 = vmatpush1.msra.mxu0 0.0
    %206 = vmatprep.subr.mxu0 0.0
    %207 = vmatpush1.msra.mxu0 0.0
    %208 = vmatprep.subr.mxu0 0.0
    %209 = vmatpush1.msra.mxu0 0.0
    %210 = vmatprep.subr.mxu0 0.0
    %211 = vmatpush1.msra.mxu0 0.0
    %212 = vmatprep.subr.mxu0 0.0
    %213 = vmatpush1.msra.mxu0 0.0
    %214 = vmatprep.subr.mxu0 0.0
    %215 = vmatpush1.msra.mxu0 0.0
    %216 = vmatprep.subr.mxu0 0.0
    %217 = vmatpush1.msra.mxu0 0.0
    %218 = vmatprep.subr.mxu0 0.0
    %219 = vmatpush1.msra.mxu0 0.0
    %220 = vmatprep.subr.mxu0 0.0
    %221 = vmatpush1.msra.mxu0 0.0
    %222 = vmatprep.subr.mxu0 0.0
    %223 = vmatpush1.msra.mxu0 0.0
    %224 = vmatprep.subr.mxu0 0.0
    %225 = vmatpush1.msra.mxu0 0.0
    %226 = vmatprep.subr.mxu0 0.0
    %227 = vmatpush1.msra.mxu0 0.0
    %228 = vmatprep.subr.mxu0 0.0
    %229 = vmatpush1.msra.mxu0 0.0
    %230 = vmatprep.subr.mxu0 0.0
    %231 = vmatpush1.msra.mxu0 0.0
    %232 = vmatprep.subr.mxu0 0.0
    %233 = vmatpush1.msra.mxu0 0.0
    %234 = vmatprep.subr.mxu0 0.0
    %235 = vmatpush1.msra.mxu0 0.0
    %236 = vmatprep.subr.mxu0 0.0
    %237 = vmatpush1.msra.mxu0 0.0
    %238 = vmatprep.subr.mxu0 0.0
    %239 = vmatpush1.msra.mxu0 0.0
    %240 = vmatprep.subr.mxu0 0.0
    %241 = vmatpush1.msra.mxu0 0.0
    %242 = vmatprep.subr.mxu0 0.0
    %243 = vmatpush1.msra.mxu0 0.0
    %244 = vmatprep.subr.mxu0 0.0
    %245 = vmatpush1.msra.mxu0 0.0
    %246 = vmatprep.subr.mxu0 0.0
    %247 = vmatpush1.msra.mxu0 0.0
    %248 = vmatprep.subr.mxu0 0.0
    %249 = vmatpush1.msra.mxu0 0.0
    %250 = vmatprep.subr.mxu0 0.0
    %251 = vmatpush1.msra.mxu0 0.0
    %252 = vmatprep.subr.mxu0 0.0
    %253 = vmatpush1.msra.mxu0 0.0
    %254 = vmatprep.subr.mxu0 0.0
    %255 = vmatpush1.msra.mxu0 0.0
    %256 = vmatprep.mubr.f32.mxu0 0.0
    %257 = vmatmul.mubr.f32.gmra.mrb[0].mxu0 %v190
    %v258 = vpop.f32.mrb[0].mxu0
    %v259 = vadd.f32 0.0, %v258
    %v260 = vpop.f32.mrb[0].mxu0
    %261 = vdwg.mxu0
    %v262 = vadd.f32 %v149, %v259
    %v263 = vxor.u32 %v262, 2147483648
    %v264 = vmul.f32 %v263, 1.442695
    %v265 = vpow.pop %v264
    %v266 = vadd.f32 %v265, 1.0
    %v267 = vrcp.pop %v266
    %v268 = vmul.f32 1.0, %v267
    %v270 = vlaneseq
    %v271 = vshrl.u32 %v270, 7
    %v272 = vsub.s32 0, %v271
    %v273 = vrot.slane %v50, %v272
    %274 = vrot.lane.b32.xlu0 %v273, 64
    %v275 = vpop.permute.xlu0 %274
    %v277 = vadd.f32 %v259, %v275
    %279 = vrot.lane.b32.xlu0 %v277, 64
    %v280 = vpop.permute.xlu0 %279
    %v282 = vmul.f32 %v268, %v280
    %284 = vrot.lane.b32.xlu0 %v282, 64
    %v285 = vpop.permute.xlu0 %284
    %v287 = vadd.f32 %v149, %v285
    %v288 = vtanh.pop %v287
    %v289 = vsub.f32 1.0, %v268
    %291 = vrot.lane.b32.xlu0 %v288, 96
    %v292 = vpop.permute.xlu0 %291
    %v294 = vmul.f32 %v289, %v292
    %295 = vrot.lane.b32.xlu0 %v187, 32
    %v296 = vpop.permute.xlu0 %295
    %v298 = vmul.f32 %v268, %v296
    %v299 = vadd.f32 %v294, %v298
    %301 = vrot.lane.b32.xlu0 %v299, 96
    %v302 = vpop.permute.xlu0 %301
    %304 = vst.msk [vmem:[#allocation2] sm:$0xff] %vm188, %v302
    %v305 = vsel %vm188, %v302, 0
    %307 = vmatprep.subr.mxu0 0.0
    %308 = vmatpush1.msra.mxu0 %v45
    %309 = vmatprep.subr.mxu0 0.0
    %310 = vmatpush1.msra.mxu0 %v46
    %311 = vmatprep.subr.mxu0 0.0
    %312 = vmatpush1.msra.mxu0 %v47
    %313 = vmatprep.subr.mxu0 0.0
    %314 = vmatpush1.msra.mxu0 %v48
    %315 = vmatprep.subr.mxu0 0.0
    %316 = vmatpush1.msra.mxu0 0.0
    %317 = vmatprep.subr.mxu0 0.0
    %318 = vmatpush1.msra.mxu0 0.0
    %319 = vmatprep.subr.mxu0 0.0
    %320 = vmatpush1.msra.mxu0 0.0
    %321 = vmatprep.subr.mxu0 0.0
    %322 = vmatpush1.msra.mxu0 0.0
    %323 = vmatprep.subr.mxu0 0.0
    %324 = vmatpush1.msra.mxu0 0.0
    %325 = vmatprep.subr.mxu0 0.0
    %326 = vmatpush1.msra.mxu0 0.0
    %327 = vmatprep.subr.mxu0 0.0
    %328 = vmatpush1.msra.mxu0 0.0
    %329 = vmatprep.subr.mxu0 0.0
    %330 = vmatpush1.msra.mxu0 0.0
    %331 = vmatprep.subr.mxu0 0.0
    %332 = vmatpush1.msra.mxu0 0.0
    %333 = vmatprep.subr.mxu0 0.0
    %334 = vmatpush1.msra.mxu0 0.0
    %335 = vmatprep.subr.mxu0 0.0
    %336 = vmatpush1.msra.mxu0 0.0
    %337 = vmatprep.subr.mxu0 0.0
    %338 = vmatpush1.msra.mxu0 0.0
    %339 = vmatprep.subr.mxu0 0.0
    %340 = vmatpush1.msra.mxu0 0.0
    %341 = vmatprep.subr.mxu0 0.0
    %342 = vmatpush1.msra.mxu0 0.0
    %343 = vmatprep.subr.mxu0 0.0
    %344 = vmatpush1.msra.mxu0 0.0
    %345 = vmatprep.subr.mxu0 0.0
    %346 = vmatpush1.msra.mxu0 0.0
    %347 = vmatprep.subr.mxu0 0.0
    %348 = vmatpush1.msra.mxu0 0.0
    %349 = vmatprep.subr.mxu0 0.0
    %350 = vmatpush1.msra.mxu0 0.0
    %351 = vmatprep.subr.mxu0 0.0
    %352 = vmatpush1.msra.mxu0 0.0
    %353 = vmatprep.subr.mxu0 0.0
    %354 = vmatpush1.msra.mxu0 0.0
    %355 = vmatprep.subr.mxu0 0.0
    %356 = vmatpush1.msra.mxu0 0.0
    %357 = vmatprep.subr.mxu0 0.0
    %358 = vmatpush1.msra.mxu0 0.0
    %359 = vmatprep.subr.mxu0 0.0
    %360 = vmatpush1.msra.mxu0 0.0
    %361 = vmatprep.subr.mxu0 0.0
    %362 = vmatpush1.msra.mxu0 0.0
    %363 = vmatprep.subr.mxu0 0.0
    %364 = vmatpush1.msra.mxu0 0.0
    %365 = vmatprep.subr.mxu0 0.0
    %366 = vmatpush1.msra.mxu0 0.0
    %367 = vmatprep.subr.mxu0 0.0
    %368 = vmatpush1.msra.mxu0 0.0
    %369 = vmatprep.subr.mxu0 0.0
    %370 = vmatpush1.msra.mxu0 0.0
    %371 = vmatprep.mubr.f32.mxu0 0.0
    %372 = vmatmul.mubr.f32.gmra.mrb[0].mxu0 %v305
    %v373 = vpop.f32.mrb[0].mxu0
    %v374 = vadd.f32 0.0, %v373
    %v375 = vpop.f32.mrb[0].mxu0
    %376 = vdwg.mxu0
    %v377 = vadd.f32 %v154, %v374
    %v378 = vxor.u32 %v377, 2147483648
    %v379 = vmul.f32 %v378, 1.442695
    %v380 = vpow.pop %v379
    %v381 = vadd.f32 %v380, 1.0
    %v382 = vrcp.pop %v381
    %v383 = vmul.f32 1.0, %v382
    %v384 = vadd.f32 %v374, %v275
    %386 = vrot.lane.b32.xlu0 %v384, 64
    %v387 = vpop.permute.xlu0 %386
    %v389 = vmul.f32 %v383, %v387
    %391 = vrot.lane.b32.xlu0 %v389, 64
    %v392 = vpop.permute.xlu0 %391
    %v394 = vadd.f32 %v154, %v392
    %v395 = vtanh.pop %v394
    %v396 = vsub.f32 1.0, %v383
    %398 = vrot.lane.b32.xlu0 %v395, 96
    %v399 = vpop.permute.xlu0 %398
    %v401 = vmul.f32 %v396, %v399
    %v402 = vmul.f32 %v383, %v299
    %v403 = vadd.f32 %v401, %v402
    %405 = vrot.lane.b32.xlu0 %v403, 96
    %v406 = vpop.permute.xlu0 %405
    %408 = vst.msk [vmem:[#allocation2 + $0x8] sm:$0xff] %vm188, %v406
    %v409 = vsel %vm188, %v406, 0
    %411 = vmatprep.subr.mxu0 0.0
    %412 = vmatpush1.msra.mxu0 %v45
    %413 = vmatprep.subr.mxu0 0.0
    %414 = vmatpush1.msra.mxu0 %v46
    %415 = vmatprep.subr.mxu0 0.0
    %416 = vmatpush1.msra.mxu0 %v47
    %417 = vmatprep.subr.mxu0 0.0
    %418 = vmatpush1.msra.mxu0 %v48
    %419 = vmatprep.subr.mxu0 0.0
    %420 = vmatpush1.msra.mxu0 0.0
    %421 = vmatprep.subr.mxu0 0.0
    %422 = vmatpush1.msra.mxu0 0.0
    %423 = vmatprep.subr.mxu0 0.0
    %424 = vmatpush1.msra.mxu0 0.0
    %425 = vmatprep.subr.mxu0 0.0
    %426 = vmatpush1.msra.mxu0 0.0
    %427 = vmatprep.subr.mxu0 0.0
    %428 = vmatpush1.msra.mxu0 0.0
    %429 = vmatprep.subr.mxu0 0.0
    %430 = vmatpush1.msra.mxu0 0.0
    %431 = vmatprep.subr.mxu0 0.0
    %432 = vmatpush1.msra.mxu0 0.0
    %433 = vmatprep.subr.mxu0 0.0
    %434 = vmatpush1.msra.mxu0 0.0
    %435 = vmatprep.subr.mxu0 0.0
    %436 = vmatpush1.msra.mxu0 0.0
    %437 = vmatprep.subr.mxu0 0.0
    %438 = vmatpush1.msra.mxu0 0.0
    %439 = vmatprep.subr.mxu0 0.0
    %440 = vmatpush1.msra.mxu0 0.0
    %441 = vmatprep.subr.mxu0 0.0
    %442 = vmatpush1.msra.mxu0 0.0
    %443 = vmatprep.subr.mxu0 0.0
    %444 = vmatpush1.msra.mxu0 0.0
    %445 = vmatprep.subr.mxu0 0.0
    %446 = vmatpush1.msra.mxu0 0.0
    %447 = vmatprep.subr.mxu0 0.0
    %448 = vmatpush1.msra.mxu0 0.0
    %449 = vmatprep.subr.mxu0 0.0
    %450 = vmatpush1.msra.mxu0 0.0
    %451 = vmatprep.subr.mxu0 0.0
    %452 = vmatpush1.msra.mxu0 0.0
    %453 = vmatprep.subr.mxu0 0.0
    %454 = vmatpush1.msra.mxu0 0.0
    %455 = vmatprep.subr.mxu0 0.0
    %456 = vmatpush1.msra.mxu0 0.0
    %457 = vmatprep.subr.mxu0 0.0
    %458 = vmatpush1.msra.mxu0 0.0
    %459 = vmatprep.subr.mxu0 0.0
    %460 = vmatpush1.msra.mxu0 0.0
    %461 = vmatprep.subr.mxu0 0.0
    %462 = vmatpush1.msra.mxu0 0.0
    %463 = vmatprep.subr.mxu0 0.0
    %464 = vmatpush1.msra.mxu0 0.0
    %465 = vmatprep.subr.mxu0 0.0
    %466 = vmatpush1.msra.mxu0 0.0
    %467 = vmatprep.subr.mxu0 0.0
    %468 = vmatpush1.msra.mxu0 0.0
    %469 = vmatprep.subr.mxu0 0.0
    %470 = vmatpush1.msra.mxu0 0.0
    %471 = vmatprep.subr.mxu0 0.0
    %472 = vmatpush1.msra.mxu0 0.0
    %473 = vmatprep.subr.mxu0 0.0
    %474 = vmatpush1.msra.mxu0 0.0
    %475 = vmatprep.mubr.f32.mxu0 0.0
    %476 = vmatmul.mubr.f32.gmra.mrb[0].mxu0 %v409
    %v477 = vpop.f32.mrb[0].mxu0
    %v478 = vadd.f32 0.0, %v477
    %v479 = vpop.f32.mrb[0].mxu0
    %480 = vdwg.mxu0
    %v481 = vadd.f32 %v159, %v478
    %v482 = vxor.u32 %v481, 2147483648
    %v483 = vmul.f32 %v482, 1.442695
    %v484 = vpow.pop %v483
    %v485 = vadd.f32 %v484, 1.0
    %v486 = vrcp.pop %v485
    %v487 = vmul.f32 1.0, %v486
    %v488 = vadd.f32 %v478, %v275
    %490 = vrot.lane.b32.xlu0 %v488, 64
    %v491 = vpop.permute.xlu0 %490
    %v493 = vmul.f32 %v487, %v491
    %495 = vrot.lane.b32.xlu0 %v493, 64
    %v496 = vpop.permute.xlu0 %495
    %v498 = vadd.f32 %v159, %v496
    %v499 = vtanh.pop %v498
    %v500 = vsub.f32 1.0, %v487
    %502 = vrot.lane.b32.xlu0 %v499, 96
    %v503 = vpop.permute.xlu0 %502
    %v505 = vmul.f32 %v500, %v503
    %v506 = vmul.f32 %v487, %v403
    %v507 = vadd.f32 %v505, %v506
    %509 = vrot.lane.b32.xlu0 %v507, 96
    %v510 = vpop.permute.xlu0 %509
    %512 = vst.msk [vmem:[#allocation2 + $0x10] sm:$0xff] %vm188, %v510
    %v513 = vsel %vm188, %v510, 0
    %515 = vmatprep.subr.mxu0 0.0
    %516 = vmatpush1.msra.mxu0 %v45
    %517 = vmatprep.subr.mxu0 0.0
    %518 = vmatpush1.msra.mxu0 %v46
    %519 = vmatprep.subr.mxu0 0.0
    %520 = vmatpush1.msra.mxu0 %v47
    %521 = vmatprep.subr.mxu0 0.0
    %522 = vmatpush1.msra.mxu0 %v48
    %523 = vmatprep.subr.mxu0 0.0
    %524 = vmatpush1.msra.mxu0 0.0
    %525 = vmatprep.subr.mxu0 0.0
    %526 = vmatpush1.msra.mxu0 0.0
    %527 = vmatprep.subr.mxu0 0.0
    %528 = vmatpush1.msra.mxu0 0.0
    %529 = vmatprep.subr.mxu0 0.0
    %530 = vmatpush1.msra.mxu0 0.0
    %531 = vmatprep.subr.mxu0 0.0
    %532 = vmatpush1.msra.mxu0 0.0
    %533 = vmatprep.subr.mxu0 0.0
    %534 = vmatpush1.msra.mxu0 0.0
    %535 = vmatprep.subr.mxu0 0.0
    %536 = vmatpush1.msra.mxu0 0.0
    %537 = vmatprep.subr.mxu0 0.0
    %538 = vmatpush1.msra.mxu0 0.0
    %539 = vmatprep.subr.mxu0 0.0
    %540 = vmatpush1.msra.mxu0 0.0
    %541 = vmatprep.subr.mxu0 0.0
    %542 = vmatpush1.msra.mxu0 0.0
    %543 = vmatprep.subr.mxu0 0.0
    %544 = vmatpush1.msra.mxu0 0.0
    %545 = vmatprep.subr.mxu0 0.0
    %546 = vmatpush1.msra.mxu0 0.0
    %547 = vmatprep.subr.mxu0 0.0
    %548 = vmatpush1.msra.mxu0 0.0
    %549 = vmatprep.subr.mxu0 0.0
    %550 = vmatpush1.msra.mxu0 0.0
    %551 = vmatprep.subr.mxu0 0.0
    %552 = vmatpush1.msra.mxu0 0.0
    %553 = vmatprep.subr.mxu0 0.0
    %554 = vmatpush1.msra.mxu0 0.0
    %555 = vmatprep.subr.mxu0 0.0
    %556 = vmatpush1.msra.mxu0 0.0
    %557 = vmatprep.subr.mxu0 0.0
    %558 = vmatpush1.msra.mxu0 0.0
    %559 = vmatprep.subr.mxu0 0.0
    %560 = vmatpush1.msra.mxu0 0.0
    %561 = vmatprep.subr.mxu0 0.0
    %562 = vmatpush1.msra.mxu0 0.0
    %563 = vmatprep.subr.mxu0 0.0
    %564 = vmatpush1.msra.mxu0 0.0
    %565 = vmatprep.subr.mxu0 0.0
    %566 = vmatpush1.msra.mxu0 0.0
    %567 = vmatprep.subr.mxu0 0.0
    %568 = vmatpush1.msra.mxu0 0.0
    %569 = vmatprep.subr.mxu0 0.0
    %570 = vmatpush1.msra.mxu0 0.0
    %571 = vmatprep.subr.mxu0 0.0
    %572 = vmatpush1.msra.mxu0 0.0
    %573 = vmatprep.subr.mxu0 0.0
    %574 = vmatpush1.msra.mxu0 0.0
    %575 = vmatprep.subr.mxu0 0.0
    %576 = vmatpush1.msra.mxu0 0.0
    %577 = vmatprep.subr.mxu0 0.0
    %578 = vmatpush1.msra.mxu0 0.0
    %579 = vmatprep.mubr.f32.mxu0 0.0
    %580 = vmatmul.mubr.f32.gmra.mrb[0].mxu0 %v513
    %v581 = vpop.f32.mrb[0].mxu0
    %v582 = vadd.f32 0.0, %v581
    %v583 = vpop.f32.mrb[0].mxu0
    %584 = vdwg.mxu0
    %v585 = vadd.f32 %v164, %v582
    %v586 = vxor.u32 %v585, 2147483648
    %v587 = vmul.f32 %v586, 1.442695
    %v588 = vpow.pop %v587
    %v589 = vadd.f32 %v588, 1.0
    %v590 = vrcp.pop %v589
    %v591 = vmul.f32 1.0, %v590
    %v592 = vadd.f32 %v582, %v275
    %594 = vrot.lane.b32.xlu0 %v592, 64
    %v595 = vpop.permute.xlu0 %594
    %v597 = vmul.f32 %v591, %v595
    %599 = vrot.lane.b32.xlu0 %v597, 64
    %v600 = vpop.permute.xlu0 %599
    %v602 = vadd.f32 %v164, %v600
    %v603 = vtanh.pop %v602
    %v604 = vsub.f32 1.0, %v591
    %606 = vrot.lane.b32.xlu0 %v603, 96
    %v607 = vpop.permute.xlu0 %606
    %v609 = vmul.f32 %v604, %v607
    %v610 = vmul.f32 %v591, %v507
    %v611 = vadd.f32 %v609, %v610
    %613 = vrot.lane.b32.xlu0 %v611, 96
    %v614 = vpop.permute.xlu0 %613
    %616 = vst.msk [vmem:[#allocation2 + $0x18] sm:$0xff] %vm188, %v614
    %v617 = vsel %vm188, %v614, 0
    %619 = vmatprep.subr.mxu0 0.0
    %620 = vmatpush1.msra.mxu0 %v45
    %621 = vmatprep.subr.mxu0 0.0
    %622 = vmatpush1.msra.mxu0 %v46
    %623 = vmatprep.subr.mxu0 0.0
    %624 = vmatpush1.msra.mxu0 %v47
    %625 = vmatprep.subr.mxu0 0.0
    %626 = vmatpush1.msra.mxu0 %v48
    %627 = vmatprep.subr.mxu0 0.0
    %628 = vmatpush1.msra.mxu0 0.0
    %629 = vmatprep.subr.mxu0 0.0
    %630 = vmatpush1.msra.mxu0 0.0
    %631 = vmatprep.subr.mxu0 0.0
    %632 = vmatpush1.msra.mxu0 0.0
    %633 = vmatprep.subr.mxu0 0.0
    %634 = vmatpush1.msra.mxu0 0.0
    %635 = vmatprep.subr.mxu0 0.0
    %636 = vmatpush1.msra.mxu0 0.0
    %637 = vmatprep.subr.mxu0 0.0
    %638 = vmatpush1.msra.mxu0 0.0
    %639 = vmatprep.subr.mxu0 0.0
    %640 = vmatpush1.msra.mxu0 0.0
    %641 = vmatprep.subr.mxu0 0.0
    %642 = vmatpush1.msra.mxu0 0.0
    %643 = vmatprep.subr.mxu0 0.0
    %644 = vmatpush1.msra.mxu0 0.0
    %645 = vmatprep.subr.mxu0 0.0
    %646 = vmatpush1.msra.mxu0 0.0
    %647 = vmatprep.subr.mxu0 0.0
    %648 = vmatpush1.msra.mxu0 0.0
    %649 = vmatprep.subr.mxu0 0.0
    %650 = vmatpush1.msra.mxu0 0.0
    %651 = vmatprep.subr.mxu0 0.0
    %652 = vmatpush1.msra.mxu0 0.0
    %653 = vmatprep.subr.mxu0 0.0
    %654 = vmatpush1.msra.mxu0 0.0
    %655 = vmatprep.subr.mxu0 0.0
    %656 = vmatpush1.msra.mxu0 0.0
    %657 = vmatprep.subr.mxu0 0.0
    %658 = vmatpush1.msra.mxu0 0.0
    %659 = vmatprep.subr.mxu0 0.0
    %660 = vmatpush1.msra.mxu0 0.0
    %661 = vmatprep.subr.mxu0 0.0
    %662 = vmatpush1.msra.mxu0 0.0
    %663 = vmatprep.subr.mxu0 0.0
    %664 = vmatpush1.msra.mxu0 0.0
    %665 = vmatprep.subr.mxu0 0.0
    %666 = vmatpush1.msra.mxu0 0.0
    %667 = vmatprep.subr.mxu0 0.0
    %668 = vmatpush1.msra.mxu0 0.0
    %669 = vmatprep.subr.mxu0 0.0
    %670 = vmatpush1.msra.mxu0 0.0
    %671 = vmatprep.subr.mxu0 0.0
    %672 = vmatpush1.msra.mxu0 0.0
    %673 = vmatprep.subr.mxu0 0.0
    %674 = vmatpush1.msra.mxu0 0.0
    %675 = vmatprep.subr.mxu0 0.0
    %676 = vmatpush1.msra.mxu0 0.0
    %677 = vmatprep.subr.mxu0 0.0
    %678 = vmatpush1.msra.mxu0 0.0
    %679 = vmatprep.subr.mxu0 0.0
    %680 = vmatpush1.msra.mxu0 0.0
    %681 = vmatprep.subr.mxu0 0.0
    %682 = vmatpush1.msra.mxu0 0.0
    %683 = vmatprep.mubr.f32.mxu0 0.0
    %684 = vmatmul.mubr.f32.gmra.mrb[0].mxu0 %v617
    %v685 = vpop.f32.mrb[0].mxu0
    %v686 = vadd.f32 0.0, %v685
    %v687 = vpop.f32.mrb[0].mxu0
    %688 = vdwg.mxu0
    %v689 = vadd.f32 %v169, %v686
    %v690 = vxor.u32 %v689, 2147483648
    %v691 = vmul.f32 %v690, 1.442695
    %v692 = vpow.pop %v691
    %v693 = vadd.f32 %v692, 1.0
    %v694 = vrcp.pop %v693
    %v695 = vmul.f32 1.0, %v694
    %v696 = vadd.f32 %v686, %v275
    %698 = vrot.lane.b32.xlu0 %v696, 64
    %v699 = vpop.permute.xlu0 %698
    %v701 = vmul.f32 %v695, %v699
    %703 = vrot.lane.b32.xlu0 %v701, 64
    %v704 = vpop.permute.xlu0 %703
    %v706 = vadd.f32 %v169, %v704
    %v707 = vtanh.pop %v706
    %v708 = vsub.f32 1.0, %v695
    %710 = vrot.lane.b32.xlu0 %v707, 96
    %v711 = vpop.permute.xlu0 %710
    %v713 = vmul.f32 %v708, %v711
    %v714 = vmul.f32 %v695, %v611
    %v715 = vadd.f32 %v713, %v714
    %717 = vrot.lane.b32.xlu0 %v715, 96
    %v718 = vpop.permute.xlu0 %717
    %720 = vst.msk [vmem:[#allocation2 + $0x20] sm:$0xff] %vm188, %v718
    %v721 = vsel %vm188, %v718, 0
    %723 = vmatprep.subr.mxu0 0.0
    %724 = vmatpush1.msra.mxu0 %v45
    %725 = vmatprep.subr.mxu0 0.0
    %726 = vmatpush1.msra.mxu0 %v46
    %727 = vmatprep.subr.mxu0 0.0
    %728 = vmatpush1.msra.mxu0 %v47
    %729 = vmatprep.subr.mxu0 0.0
    %730 = vmatpush1.msra.mxu0 %v48
    %731 = vmatprep.subr.mxu0 0.0
    %732 = vmatpush1.msra.mxu0 0.0
    %733 = vmatprep.subr.mxu0 0.0
    %734 = vmatpush1.msra.mxu0 0.0
    %735 = vmatprep.subr.mxu0 0.0
    %736 = vmatpush1.msra.mxu0 0.0
    %737 = vmatprep.subr.mxu0 0.0
    %738 = vmatpush1.msra.mxu0 0.0
    %739 = vmatprep.subr.mxu0 0.0
    %740 = vmatpush1.msra.mxu0 0.0
    %741 = vmatprep.subr.mxu0 0.0
    %742 = vmatpush1.msra.mxu0 0.0
    %743 = vmatprep.subr.mxu0 0.0
    %744 = vmatpush1.msra.mxu0 0.0
    %745 = vmatprep.subr.mxu0 0.0
    %746 = vmatpush1.msra.mxu0 0.0
    %747 = vmatprep.subr.mxu0 0.0
    %748 = vmatpush1.msra.mxu0 0.0
    %749 = vmatprep.subr.mxu0 0.0
    %750 = vmatpush1.msra.mxu0 0.0
    %751 = vmatprep.subr.mxu0 0.0
    %752 = vmatpush1.msra.mxu0 0.0
    %753 = vmatprep.subr.mxu0 0.0
    %754 = vmatpush1.msra.mxu0 0.0
    %755 = vmatprep.subr.mxu0 0.0
    %756 = vmatpush1.msra.mxu0 0.0
    %757 = vmatprep.subr.mxu0 0.0
    %758 = vmatpush1.msra.mxu0 0.0
    %759 = vmatprep.subr.mxu0 0.0
    %760 = vmatpush1.msra.mxu0 0.0
    %761 = vmatprep.subr.mxu0 0.0
    %762 = vmatpush1.msra.mxu0 0.0
    %763 = vmatprep.subr.mxu0 0.0
    %764 = vmatpush1.msra.mxu0 0.0
    %765 = vmatprep.subr.mxu0 0.0
    %766 = vmatpush1.msra.mxu0 0.0
    %767 = vmatprep.subr.mxu0 0.0
    %768 = vmatpush1.msra.mxu0 0.0
    %769 = vmatprep.subr.mxu0 0.0
    %770 = vmatpush1.msra.mxu0 0.0
    %771 = vmatprep.subr.mxu0 0.0
    %772 = vmatpush1.msra.mxu0 0.0
    %773 = vmatprep.subr.mxu0 0.0
    %774 = vmatpush1.msra.mxu0 0.0
    %775 = vmatprep.subr.mxu0 0.0
    %776 = vmatpush1.msra.mxu0 0.0
    %777 = vmatprep.subr.mxu0 0.0
    %778 = vmatpush1.msra.mxu0 0.0
    %779 = vmatprep.subr.mxu0 0.0
    %780 = vmatpush1.msra.mxu0 0.0
    %781 = vmatprep.subr.mxu0 0.0
    %782 = vmatpush1.msra.mxu0 0.0
    %783 = vmatprep.subr.mxu0 0.0
    %784 = vmatpush1.msra.mxu0 0.0
    %785 = vmatprep.subr.mxu0 0.0
    %786 = vmatpush1.msra.mxu0 0.0
    %787 = vmatprep.mubr.f32.mxu0 0.0
    %788 = vmatmul.mubr.f32.gmra.mrb[0].mxu0 %v721
    %v789 = vpop.f32.mrb[0].mxu0
    %v790 = vadd.f32 0.0, %v789
    %v791 = vpop.f32.mrb[0].mxu0
    %792 = vdwg.mxu0
    %v793 = vadd.f32 %v174, %v790
    %v794 = vxor.u32 %v793, 2147483648
    %v795 = vmul.f32 %v794, 1.442695
    %v796 = vpow.pop %v795
    %v797 = vadd.f32 %v796, 1.0
    %v798 = vrcp.pop %v797
    %v799 = vmul.f32 1.0, %v798
    %v800 = vadd.f32 %v790, %v275
    %802 = vrot.lane.b32.xlu0 %v800, 64
    %v803 = vpop.permute.xlu0 %802
    %v805 = vmul.f32 %v799, %v803
    %807 = vrot.lane.b32.xlu0 %v805, 64
    %v808 = vpop.permute.xlu0 %807
    %v810 = vadd.f32 %v174, %v808
    %v811 = vtanh.pop %v810
    %v812 = vsub.f32 1.0, %v799
    %814 = vrot.lane.b32.xlu0 %v811, 96
    %v815 = vpop.permute.xlu0 %814
    %v817 = vmul.f32 %v812, %v815
    %v818 = vmul.f32 %v799, %v715
    %v819 = vadd.f32 %v817, %v818
    %821 = vrot.lane.b32.xlu0 %v819, 96
    %v822 = vpop.permute.xlu0 %821
    %824 = vst.msk [vmem:[#allocation2 + $0x28] sm:$0xff] %vm188, %v822
    %v825 = vsel %vm188, %v822, 0
    %827 = vmatprep.subr.mxu0 0.0
    %828 = vmatpush1.msra.mxu0 %v45
    %829 = vmatprep.subr.mxu0 0.0
    %830 = vmatpush1.msra.mxu0 %v46
    %831 = vmatprep.subr.mxu0 0.0
    %832 = vmatpush1.msra.mxu0 %v47
    %833 = vmatprep.subr.mxu0 0.0
    %834 = vmatpush1.msra.mxu0 %v48
    %835 = vmatprep.subr.mxu0 0.0
    %836 = vmatpush1.msra.mxu0 0.0
    %837 = vmatprep.subr.mxu0 0.0
    %838 = vmatpush1.msra.mxu0 0.0
    %839 = vmatprep.subr.mxu0 0.0
    %840 = vmatpush1.msra.mxu0 0.0
    %841 = vmatprep.subr.mxu0 0.0
    %842 = vmatpush1.msra.mxu0 0.0
    %843 = vmatprep.subr.mxu0 0.0
    %844 = vmatpush1.msra.mxu0 0.0
    %845 = vmatprep.subr.mxu0 0.0
    %846 = vmatpush1.msra.mxu0 0.0
    %847 = vmatprep.subr.mxu0 0.0
    %848 = vmatpush1.msra.mxu0 0.0
    %849 = vmatprep.subr.mxu0 0.0
    %850 = vmatpush1.msra.mxu0 0.0
    %851 = vmatprep.subr.mxu0 0.0
    %852 = vmatpush1.msra.mxu0 0.0
    %853 = vmatprep.subr.mxu0 0.0
    %854 = vmatpush1.msra.mxu0 0.0
    %855 = vmatprep.subr.mxu0 0.0
    %856 = vmatpush1.msra.mxu0 0.0
    %857 = vmatprep.subr.mxu0 0.0
    %858 = vmatpush1.msra.mxu0 0.0
    %859 = vmatprep.subr.mxu0 0.0
    %860 = vmatpush1.msra.mxu0 0.0
    %861 = vmatprep.subr.mxu0 0.0
    %862 = vmatpush1.msra.mxu0 0.0
    %863 = vmatprep.subr.mxu0 0.0
    %864 = vmatpush1.msra.mxu0 0.0
    %865 = vmatprep.subr.mxu0 0.0
    %866 = vmatpush1.msra.mxu0 0.0
    %867 = vmatprep.subr.mxu0 0.0
    %868 = vmatpush1.msra.mxu0 0.0
    %869 = vmatprep.subr.mxu0 0.0
    %870 = vmatpush1.msra.mxu0 0.0
    %871 = vmatprep.subr.mxu0 0.0
    %872 = vmatpush1.msra.mxu0 0.0
    %873 = vmatprep.subr.mxu0 0.0
    %874 = vmatpush1.msra.mxu0 0.0
    %875 = vmatprep.subr.mxu0 0.0
    %876 = vmatpush1.msra.mxu0 0.0
    %877 = vmatprep.subr.mxu0 0.0
    %878 = vmatpush1.msra.mxu0 0.0
    %879 = vmatprep.subr.mxu0 0.0
    %880 = vmatpush1.msra.mxu0 0.0
    %881 = vmatprep.subr.mxu0 0.0
    %882 = vmatpush1.msra.mxu0 0.0
    %883 = vmatprep.subr.mxu0 0.0
    %884 = vmatpush1.msra.mxu0 0.0
    %885 = vmatprep.subr.mxu0 0.0
    %886 = vmatpush1.msra.mxu0 0.0
    %887 = vmatprep.subr.mxu0 0.0
    %888 = vmatpush1.msra.mxu0 0.0
    %889 = vmatprep.subr.mxu0 0.0
    %890 = vmatpush1.msra.mxu0 0.0
    %891 = vmatprep.mubr.f32.mxu0 0.0
    %892 = vmatmul.mubr.f32.gmra.mrb[0].mxu0 %v825
    %v893 = vpop.f32.mrb[0].mxu0
    %v894 = vadd.f32 0.0, %v893
    %v895 = vpop.f32.mrb[0].mxu0
    %896 = vdwg.mxu0
    %v897 = vadd.f32 %v179, %v894
    %v898 = vxor.u32 %v897, 2147483648
    %v899 = vmul.f32 %v898, 1.442695
    %v900 = vpow.pop %v899
    %v901 = vadd.f32 %v900, 1.0
    %v902 = vrcp.pop %v901
    %v903 = vmul.f32 1.0, %v902
    %v904 = vadd.f32 %v894, %v275
    %906 = vrot.lane.b32.xlu0 %v904, 64
    %v907 = vpop.permute.xlu0 %906
    %v909 = vmul.f32 %v903, %v907
    %911 = vrot.lane.b32.xlu0 %v909, 64
    %v912 = vpop.permute.xlu0 %911
    %v914 = vadd.f32 %v179, %v912
    %v915 = vtanh.pop %v914
    %v916 = vsub.f32 1.0, %v903
    %918 = vrot.lane.b32.xlu0 %v915, 96
    %v919 = vpop.permute.xlu0 %918
    %v921 = vmul.f32 %v916, %v919
    %v922 = vmul.f32 %v903, %v819
    %v923 = vadd.f32 %v921, %v922
    %925 = vrot.lane.b32.xlu0 %v923, 96
    %v926 = vpop.permute.xlu0 %925
    %928 = vst.msk [vmem:[#allocation2 + $0x30] sm:$0xff] %vm188, %v926
    %v929 = vsel %vm188, %v926, 0
    %931 = vmatprep.subr.mxu0 0.0
    %932 = vmatpush1.msra.mxu0 %v45
    %933 = vmatprep.subr.mxu0 0.0
    %934 = vmatpush1.msra.mxu0 %v46
    %935 = vmatprep.subr.mxu0 0.0
    %936 = vmatpush1.msra.mxu0 %v47
    %937 = vmatprep.subr.mxu0 0.0
    %938 = vmatpush1.msra.mxu0 %v48
    %939 = vmatprep.subr.mxu0 0.0
    %940 = vmatpush1.msra.mxu0 0.0
    %941 = vmatprep.subr.mxu0 0.0
    %942 = vmatpush1.msra.mxu0 0.0
    %943 = vmatprep.subr.mxu0 0.0
    %944 = vmatpush1.msra.mxu0 0.0
    %945 = vmatprep.subr.mxu0 0.0
    %946 = vmatpush1.msra.mxu0 0.0
    %947 = vmatprep.subr.mxu0 0.0
    %948 = vmatpush1.msra.mxu0 0.0
    %949 = vmatprep.subr.mxu0 0.0
    %950 = vmatpush1.msra.mxu0 0.0
    %951 = vmatprep.subr.mxu0 0.0
    %952 = vmatpush1.msra.mxu0 0.0
    %953 = vmatprep.subr.mxu0 0.0
    %954 = vmatpush1.msra.mxu0 0.0
    %955 = vmatprep.subr.mxu0 0.0
    %956 = vmatpush1.msra.mxu0 0.0
    %957 = vmatprep.subr.mxu0 0.0
    %958 = vmatpush1.msra.mxu0 0.0
    %959 = vmatprep.subr.mxu0 0.0
    %960 = vmatpush1.msra.mxu0 0.0
    %961 = vmatprep.subr.mxu0 0.0
    %962 = vmatpush1.msra.mxu0 0.0
    %963 = vmatprep.subr.mxu0 0.0
    %964 = vmatpush1.msra.mxu0 0.0
    %965 = vmatprep.subr.mxu0 0.0
    %966 = vmatpush1.msra.mxu0 0.0
    %967 = vmatprep.subr.mxu0 0.0
    %968 = vmatpush1.msra.mxu0 0.0
    %969 = vmatprep.subr.mxu0 0.0
    %970 = vmatpush1.msra.mxu0 0.0
    %971 = vmatprep.subr.mxu0 0.0
    %972 = vmatpush1.msra.mxu0 0.0
    %973 = vmatprep.subr.mxu0 0.0
    %974 = vmatpush1.msra.mxu0 0.0
    %975 = vmatprep.subr.mxu0 0.0
    %976 = vmatpush1.msra.mxu0 0.0
    %977 = vmatprep.subr.mxu0 0.0
    %978 = vmatpush1.msra.mxu0 0.0
    %979 = vmatprep.subr.mxu0 0.0
    %980 = vmatpush1.msra.mxu0 0.0
    %981 = vmatprep.subr.mxu0 0.0
    %982 = vmatpush1.msra.mxu0 0.0
    %983 = vmatprep.subr.mxu0 0.0
    %984 = vmatpush1.msra.mxu0 0.0
    %985 = vmatprep.subr.mxu0 0.0
    %986 = vmatpush1.msra.mxu0 0.0
    %987 = vmatprep.subr.mxu0 0.0
    %988 = vmatpush1.msra.mxu0 0.0
    %989 = vmatprep.subr.mxu0 0.0
    %990 = vmatpush1.msra.mxu0 0.0
    %991 = vmatprep.subr.mxu0 0.0
    %992 = vmatpush1.msra.mxu0 0.0
    %993 = vmatprep.subr.mxu0 0.0
    %994 = vmatpush1.msra.mxu0 0.0
    %995 = vmatprep.mubr.f32.mxu0 0.0
    %996 = vmatmul.mubr.f32.gmra.mrb[0].mxu0 %v929
    %v997 = vpop.f32.mrb[0].mxu0
    %v998 = vadd.f32 0.0, %v997
    %v999 = vpop.f32.mrb[0].mxu0
    %1000 = vdwg.mxu0
    %v1001 = vadd.f32 %v184, %v998
    %v1002 = vxor.u32 %v1001, 2147483648
    %v1003 = vmul.f32 %v1002, 1.442695
    %v1004 = vpow.pop %v1003
    %v1005 = vadd.f32 %v1004, 1.0
    %v1006 = vrcp.pop %v1005
    %v1007 = vmul.f32 1.0, %v1006
    %v1008 = vadd.f32 %v998, %v275
    %1010 = vrot.lane.b32.xlu0 %v1008, 64
    %v1011 = vpop.permute.xlu0 %1010
    %v1013 = vmul.f32 %v1007, %v1011
    %1015 = vrot.lane.b32.xlu0 %v1013, 64
    %v1016 = vpop.permute.xlu0 %1015
    %v1018 = vadd.f32 %v184, %v1016
    %v1019 = vtanh.pop %v1018
    %v1020 = vsub.f32 1.0, %v1007
    %1022 = vrot.lane.b32.xlu0 %v1019, 96
    %v1023 = vpop.permute.xlu0 %1022
    %v1025 = vmul.f32 %v1020, %v1023
    %v1026 = vmul.f32 %v1007, %v923
    %v1027 = vadd.f32 %v1025, %v1026
    %1029 = vrot.lane.b32.xlu0 %v1027, 96
    %v1030 = vpop.permute.xlu0 %1029
    %1032 = vst.msk [vmem:[#allocation2 + $0x38] sm:$0xff] %vm188, %v1030
    %1033 = vst.msk [vmem:[#allocation3] sm:$0xff] %vm188, %v1030
    %v1034 = vld [vmem:[#allocation2] sm:$0xff]
    %v1035 = vld [vmem:[#allocation2 + $0x8] sm:$0xff]
    %v1036 = vld [vmem:[#allocation2 + $0x10] sm:$0xff]
    %v1037 = vld [vmem:[#allocation2 + $0x18] sm:$0xff]
    %v1038 = vld [vmem:[#allocation2 + $0x20] sm:$0xff]
    %v1039 = vld [vmem:[#allocation2 + $0x28] sm:$0xff]
    %v1040 = vld [vmem:[#allocation2 + $0x30] sm:$0xff]
    %v1041 = vld [vmem:[#allocation2 + $0x38] sm:$0xff]
    %v1042 = vld [vmem:[%s3] sm:$0xff]
    %v1043 = vld [vmem:[%s3 + $0x8] sm:$0xff]
    %v1044 = vld [vmem:[%s3 + $0x10] sm:$0xff]
    %v1045 = vld [vmem:[%s3 + $0x18] sm:$0xff]
    %s1046 = scalar_lea.vmem %s4, 32
    %v1047 = vld [vmem:[%s1046] sm:$0xff]
    %v1048 = vld [vmem:[%s1046 + $0x8] sm:$0xff]
    %v1049 = vld [vmem:[%s1046 + $0x10] sm:$0xff]
    %v1050 = vld [vmem:[%s1046 + $0x18] sm:$0xff]
    %s1051 = scalar_lea.vmem %s5, 1
    %v1052 = vld [vmem:[%s1051] sm:$0x1]
    %s1053 = scalar_lea.vmem %s6, 1
    %v1054 = vld [vmem:[%s1053] sm:$0x1]
    %v1056 = vlaneseq
    %v1057 = vshrl.u32 %v1056, 7
    %v1058 = vsub.s32 0, %v1057
    %v1059 = vrot.slane %v1052, %v1058
    %v1062 = vsel %vm188, %v1034, 0
    %v1065 = vsel %vm188, %v1035, 0
    %v1068 = vsel %vm188, %v1036, 0
    %v1071 = vsel %vm188, %v1037, 0
    %v1074 = vsel %vm188, %v1038, 0
    %v1077 = vsel %vm188, %v1039, 0
    %v1080 = vsel %vm188, %v1040, 0
    %v1083 = vsel %vm188, %v1041, 0
    %1085 = vmatprep.subr.mxu0 0.0
    %1086 = vmatpush1.msra.mxu0 %v1042
    %1087 = vmatprep.subr.mxu0 0.0
    %1088 = vmatpush1.msra.mxu0 %v1043
    %1089 = vmatprep.subr.mxu0 0.0
    %1090 = vmatpush1.msra.mxu0 %v1044
    %1091 = vmatprep.subr.mxu0 0.0
    %1092 = vmatpush1.msra.mxu0 %v1045
    %1093 = vmatprep.subr.mxu0 0.0
    %1094 = vmatpush1.msra.mxu0 0.0
    %1095 = vmatprep.subr.mxu0 0.0
    %1096 = vmatpush1.msra.mxu0 0.0
    %1097 = vmatprep.subr.mxu0 0.0
    %1098 = vmatpush1.msra.mxu0 0.0
    %1099 = vmatprep.subr.mxu0 0.0
    %1100 = vmatpush1.msra.mxu0 0.0
    %1101 = vmatprep.subr.mxu0 0.0
    %1102 = vmatpush1.msra.mxu0 0.0
    %1103 = vmatprep.subr.mxu0 0.0
    %1104 = vmatpush1.msra.mxu0 0.0
    %1105 = vmatprep.subr.mxu0 0.0
    %1106 = vmatpush1.msra.mxu0 0.0
    %1107 = vmatprep.subr.mxu0 0.0
    %1108 = vmatpush1.msra.mxu0 0.0
    %1109 = vmatprep.subr.mxu0 0.0
    %1110 = vmatpush1.msra.mxu0 0.0
    %1111 = vmatprep.subr.mxu0 0.0
    %1112 = vmatpush1.msra.mxu0 0.0
    %1113 = vmatprep.subr.mxu0 0.0
    %1114 = vmatpush1.msra.mxu0 0.0
    %1115 = vmatprep.subr.mxu0 0.0
    %1116 = vmatpush1.msra.mxu0 0.0
    %1117 = vmatprep.subr.mxu0 0.0
    %1118 = vmatpush1.msra.mxu0 0.0
    %1119 = vmatprep.subr.mxu0 0.0
    %1120 = vmatpush1.msra.mxu0 0.0
    %1121 = vmatprep.subr.mxu0 0.0
    %1122 = vmatpush1.msra.mxu0 0.0
    %1123 = vmatprep.subr.mxu0 0.0
    %1124 = vmatpush1.msra.mxu0 0.0
    %1125 = vmatprep.subr.mxu0 0.0
    %1126 = vmatpush1.msra.mxu0 0.0
    %1127 = vmatprep.subr.mxu0 0.0
    %1128 = vmatpush1.msra.mxu0 0.0
    %1129 = vmatprep.subr.mxu0 0.0
    %1130 = vmatpush1.msra.mxu0 0.0
    %1131 = vmatprep.subr.mxu0 0.0
    %1132 = vmatpush1.msra.mxu0 0.0
    %1133 = vmatprep.subr.mxu0 0.0
    %1134 = vmatpush1.msra.mxu0 0.0
    %1135 = vmatprep.subr.mxu0 0.0
    %1136 = vmatpush1.msra.mxu0 0.0
    %1137 = vmatprep.subr.mxu0 0.0
    %1138 = vmatpush1.msra.mxu0 0.0
    %1139 = vmatprep.subr.mxu0 0.0
    %1140 = vmatpush1.msra.mxu0 0.0
    %1141 = vmatprep.subr.mxu0 0.0
    %1142 = vmatpush1.msra.mxu0 0.0
    %1143 = vmatprep.subr.mxu0 0.0
    %1144 = vmatpush1.msra.mxu0 0.0
    %1145 = vmatprep.subr.mxu0 0.0
    %1146 = vmatpush1.msra.mxu0 0.0
    %1147 = vmatprep.subr.mxu0 0.0
    %1148 = vmatpush1.msra.mxu0 0.0
    %1149 = vmatprep.mubr.f32.mxu0 0.0
    %1150 = vmatmul.mubr.f32.gmra.mrb[0].mxu0 %v1062
    %v1151 = vpop.f32.mrb[0].mxu0
    %v1152 = vadd.f32 %v1059, %v1151
    %v1153 = vpop.f32.mrb[0].mxu0
    %1154 = vmatprep.mubr.f32.mxu0 0.0
    %1155 = vmatmul.mubr.f32.gmra.mrb[0].mxu0 %v1065
    %v1156 = vpop.f32.mrb[0].mxu0
    %v1157 = vadd.f32 %v1059, %v1156
    %v1158 = vpop.f32.mrb[0].mxu0
    %1159 = vmatprep.mubr.f32.mxu0 0.0
    %1160 = vmatmul.mubr.f32.gmra.mrb[0].mxu0 %v1068
    %v1161 = vpop.f32.mrb[0].mxu0
    %v1162 = vadd.f32 %v1059, %v1161
    %v1163 = vpop.f32.mrb[0].mxu0
    %1164 = vmatprep.mubr.f32.mxu0 0.0
    %1165 = vmatmul.mubr.f32.gmra.mrb[0].mxu0 %v1071
    %v1166 = vpop.f32.mrb[0].mxu0
    %v1167 = vadd.f32 %v1059, %v1166
    %v1168 = vpop.f32.mrb[0].mxu0
    %1169 = vmatprep.mubr.f32.mxu0 0.0
    %1170 = vmatmul.mubr.f32.gmra.mrb[0].mxu0 %v1074
    %v1171 = vpop.f32.mrb[0].mxu0
    %v1172 = vadd.f32 %v1059, %v1171
    %v1173 = vpop.f32.mrb[0].mxu0
    %1174 = vmatprep.mubr.f32.mxu0 0.0
    %1175 = vmatmul.mubr.f32.gmra.mrb[0].mxu0 %v1077
    %v1176 = vpop.f32.mrb[0].mxu0
    %v1177 = vadd.f32 %v1059, %v1176
    %v1178 = vpop.f32.mrb[0].mxu0
    %1179 = vmatprep.mubr.f32.mxu0 0.0
    %1180 = vmatmul.mubr.f32.gmra.mrb[0].mxu0 %v1080
    %v1181 = vpop.f32.mrb[0].mxu0
    %v1182 = vadd.f32 %v1059, %v1181
    %v1183 = vpop.f32.mrb[0].mxu0
    %1184 = vmatprep.mubr.f32.mxu0 0.0
    %1185 = vmatmul.mubr.f32.gmra.mrb[0].mxu0 %v1083
    %v1186 = vpop.f32.mrb[0].mxu0
    %v1187 = vadd.f32 %v1059, %v1186
    %v1188 = vpop.f32.mrb[0].mxu0
    %1189 = vdwg.mxu0
    %s1190 = scalar_lea.vmem %s1, 8
    %v1191 = vld [vmem:[%s1190] sm:$0xff]
    %v1193 = vsel %vm188, %v1191, 0
    %1195 = vmatprep.subr.mxu0 0.0
    %1196 = vmatpush1.msra.mxu0 %v1047
    %1197 = vmatprep.subr.mxu0 0.0
    %1198 = vmatpush1.msra.mxu0 %v1048
    %1199 = vmatprep.subr.mxu0 0.0
    %1200 = vmatpush1.msra.mxu0 %v1049
    %1201 = vmatprep.subr.mxu0 0.0
    %1202 = vmatpush1.msra.mxu0 %v1050
    %1203 = vmatprep.subr.mxu0 0.0
    %1204 = vmatpush1.msra.mxu0 0.0
    %1205 = vmatprep.subr.mxu0 0.0
    %1206 = vmatpush1.msra.mxu0 0.0
    %1207 = vmatprep.subr.mxu0 0.0
    %1208 = vmatpush1.msra.mxu0 0.0
    %1209 = vmatprep.subr.mxu0 0.0
    %1210 = vmatpush1.msra.mxu0 0.0
    %1211 = vmatprep.subr.mxu0 0.0
    %1212 = vmatpush1.msra.mxu0 0.0
    %1213 = vmatprep.subr.mxu0 0.0
    %1214 = vmatpush1.msra.mxu0 0.0
    %1215 = vmatprep.subr.mxu0 0.0
    %1216 = vmatpush1.msra.mxu0 0.0
    %1217 = vmatprep.subr.mxu0 0.0
    %1218 = vmatpush1.msra.mxu0 0.0
    %1219 = vmatprep.subr.mxu0 0.0
    %1220 = vmatpush1.msra.mxu0 0.0
    %1221 = vmatprep.subr.mxu0 0.0
    %1222 = vmatpush1.msra.mxu0 0.0
    %1223 = vmatprep.subr.mxu0 0.0
    %1224 = vmatpush1.msra.mxu0 0.0
    %1225 = vmatprep.subr.mxu0 0.0
    %1226 = vmatpush1.msra.mxu0 0.0
    %1227 = vmatprep.subr.mxu0 0.0
    %1228 = vmatpush1.msra.mxu0 0.0
    %1229 = vmatprep.subr.mxu0 0.0
    %1230 = vmatpush1.msra.mxu0 0.0
    %1231 = vmatprep.subr.mxu0 0.0
    %1232 = vmatpush1.msra.mxu0 0.0
    %1233 = vmatprep.subr.mxu0 0.0
    %1234 = vmatpush1.msra.mxu0 0.0
    %1235 = vmatprep.subr.mxu0 0.0
    %1236 = vmatpush1.msra.mxu0 0.0
    %1237 = vmatprep.subr.mxu0 0.0
    %1238 = vmatpush1.msra.mxu0 0.0
    %1239 = vmatprep.subr.mxu0 0.0
    %1240 = vmatpush1.msra.mxu0 0.0
    %1241 = vmatprep.subr.mxu0 0.0
    %1242 = vmatpush1.msra.mxu0 0.0
    %1243 = vmatprep.subr.mxu0 0.0
    %1244 = vmatpush1.msra.mxu0 0.0
    %1245 = vmatprep.subr.mxu0 0.0
    %1246 = vmatpush1.msra.mxu0 0.0
    %1247 = vmatprep.subr.mxu0 0.0
    %1248 = vmatpush1.msra.mxu0 0.0
    %1249 = vmatprep.subr.mxu0 0.0
    %1250 = vmatpush1.msra.mxu0 0.0
    %1251 = vmatprep.subr.mxu0 0.0
    %1252 = vmatpush1.msra.mxu0 0.0
    %1253 = vmatprep.subr.mxu0 0.0
    %1254 = vmatpush1.msra.mxu0 0.0
    %1255 = vmatprep.subr.mxu0 0.0
    %1256 = vmatpush1.msra.mxu0 0.0
    %1257 = vmatprep.subr.mxu0 0.0
    %1258 = vmatpush1.msra.mxu0 0.0
    %1259 = vmatprep.mubr.f32.mxu0 0.0
    %1260 = vmatmul.mubr.f32.gmra.mrb[0].mxu0 %v1193
    %v1261 = vpop.f32.mrb[0].mxu0
    %v1262 = vadd.f32 0.0, %v1261
    %v1263 = vpop.f32.mrb[0].mxu0
    %1264 = vdwg.mxu0
    %v1265 = vadd.f32 %v1152, %v1262
    %v1266 = vxor.u32 %v1265, 2147483648
    %v1267 = vmul.f32 %v1266, 1.442695
    %v1268 = vpow.pop %v1267
    %v1269 = vadd.f32 %v1268, 1.0
    %v1270 = vrcp.pop %v1269
    %v1271 = vmul.f32 1.0, %v1270
    %v1273 = vlaneseq
    %v1274 = vshrl.u32 %v1273, 7
    %v1275 = vsub.s32 0, %v1274
    %v1276 = vrot.slane %v1054, %v1275
    %1277 = vrot.lane.b32.xlu0 %v1276, 64
    %v1278 = vpop.permute.xlu0 %1277
    %v1280 = vadd.f32 %v1262, %v1278
    %1282 = vrot.lane.b32.xlu0 %v1280, 64
    %v1283 = vpop.permute.xlu0 %1282
    %v1285 = vmul.f32 %v1271, %v1283
    %1287 = vrot.lane.b32.xlu0 %v1285, 64
    %v1288 = vpop.permute.xlu0 %1287
    %v1290 = vadd.f32 %v1152, %v1288
    %v1291 = vtanh.pop %v1290
    %v1292 = vsub.f32 1.0, %v1271
    %1294 = vrot.lane.b32.xlu0 %v1291, 96
    %v1295 = vpop.permute.xlu0 %1294
    %v1297 = vmul.f32 %v1292, %v1295
    %1298 = vrot.lane.b32.xlu0 %v1191, 32
    %v1299 = vpop.permute.xlu0 %1298
    %v1301 = vmul.f32 %v1271, %v1299
    %v1302 = vadd.f32 %v1297, %v1301
    %1304 = vrot.lane.b32.xlu0 %v1302, 96
    %v1305 = vpop.permute.xlu0 %1304
    %v1306 = vsel %vm188, %v1305, 0
    %1308 = vmatprep.subr.mxu0 0.0
    %1309 = vmatpush1.msra.mxu0 %v1047
    %1310 = vmatprep.subr.mxu0 0.0
    %1311 = vmatpush1.msra.mxu0 %v1048
    %1312 = vmatprep.subr.mxu0 0.0
    %1313 = vmatpush1.msra.mxu0 %v1049
    %1314 = vmatprep.subr.mxu0 0.0
    %1315 = vmatpush1.msra.mxu0 %v1050
    %1316 = vmatprep.subr.mxu0 0.0
    %1317 = vmatpush1.msra.mxu0 0.0
    %1318 = vmatprep.subr.mxu0 0.0
    %1319 = vmatpush1.msra.mxu0 0.0
    %1320 = vmatprep.subr.mxu0 0.0
    %1321 = vmatpush1.msra.mxu0 0.0
    %1322 = vmatprep.subr.mxu0 0.0
    %1323 = vmatpush1.msra.mxu0 0.0
    %1324 = vmatprep.subr.mxu0 0.0
    %1325 = vmatpush1.msra.mxu0 0.0
    %1326 = vmatprep.subr.mxu0 0.0
    %1327 = vmatpush1.msra.mxu0 0.0
    %1328 = vmatprep.subr.mxu0 0.0
    %1329 = vmatpush1.msra.mxu0 0.0
    %1330 = vmatprep.subr.mxu0 0.0
    %1331 = vmatpush1.msra.mxu0 0.0
    %1332 = vmatprep.subr.mxu0 0.0
    %1333 = vmatpush1.msra.mxu0 0.0
    %1334 = vmatprep.subr.mxu0 0.0
    %1335 = vmatpush1.msra.mxu0 0.0
    %1336 = vmatprep.subr.mxu0 0.0
    %1337 = vmatpush1.msra.mxu0 0.0
    %1338 = vmatprep.subr.mxu0 0.0
    %1339 = vmatpush1.msra.mxu0 0.0
    %1340 = vmatprep.subr.mxu0 0.0
    %1341 = vmatpush1.msra.mxu0 0.0
    %1342 = vmatprep.subr.mxu0 0.0
    %1343 = vmatpush1.msra.mxu0 0.0
    %1344 = vmatprep.subr.mxu0 0.0
    %1345 = vmatpush1.msra.mxu0 0.0
    %1346 = vmatprep.subr.mxu0 0.0
    %1347 = vmatpush1.msra.mxu0 0.0
    %1348 = vmatprep.subr.mxu0 0.0
    %1349 = vmatpush1.msra.mxu0 0.0
    %1350 = vmatprep.subr.mxu0 0.0
    %1351 = vmatpush1.msra.mxu0 0.0
    %1352 = vmatprep.subr.mxu0 0.0
    %1353 = vmatpush1.msra.mxu0 0.0
    %1354 = vmatprep.subr.mxu0 0.0
    %1355 = vmatpush1.msra.mxu0 0.0
    %1356 = vmatprep.subr.mxu0 0.0
    %1357 = vmatpush1.msra.mxu0 0.0
    %1358 = vmatprep.subr.mxu0 0.0
    %1359 = vmatpush1.msra.mxu0 0.0
    %1360 = vmatprep.subr.mxu0 0.0
    %1361 = vmatpush1.msra.mxu0 0.0
    %1362 = vmatprep.subr.mxu0 0.0
    %1363 = vmatpush1.msra.mxu0 0.0
    %1364 = vmatprep.subr.mxu0 0.0
    %1365 = vmatpush1.msra.mxu0 0.0
    %1366 = vmatprep.subr.mxu0 0.0
    %1367 = vmatpush1.msra.mxu0 0.0
    %1368 = vmatprep.subr.mxu0 0.0
    %1369 = vmatpush1.msra.mxu0 0.0
    %1370 = vmatprep.subr.mxu0 0.0
    %1371 = vmatpush1.msra.mxu0 0.0
    %1372 = vmatprep.mubr.f32.mxu0 0.0
    %1373 = vmatmul.mubr.f32.gmra.mrb[0].mxu0 %v1306
    %v1374 = vpop.f32.mrb[0].mxu0
    %v1375 = vadd.f32 0.0, %v1374
    %v1376 = vpop.f32.mrb[0].mxu0
    %1377 = vdwg.mxu0
    %v1378 = vadd.f32 %v1157, %v1375
    %v1379 = vxor.u32 %v1378, 2147483648
    %v1380 = vmul.f32 %v1379, 1.442695
    %v1381 = vpow.pop %v1380
    %v1382 = vadd.f32 %v1381, 1.0
    %v1383 = vrcp.pop %v1382
    %v1384 = vmul.f32 1.0, %v1383
    %v1385 = vadd.f32 %v1375, %v1278
    %1387 = vrot.lane.b32.xlu0 %v1385, 64
    %v1388 = vpop.permute.xlu0 %1387
    %v1390 = vmul.f32 %v1384, %v1388
    %1392 = vrot.lane.b32.xlu0 %v1390, 64
    %v1393 = vpop.permute.xlu0 %1392
    %v1395 = vadd.f32 %v1157, %v1393
    %v1396 = vtanh.pop %v1395
    %v1397 = vsub.f32 1.0, %v1384
    %1399 = vrot.lane.b32.xlu0 %v1396, 96
    %v1400 = vpop.permute.xlu0 %1399
    %v1402 = vmul.f32 %v1397, %v1400
    %v1403 = vmul.f32 %v1384, %v1302
    %v1404 = vadd.f32 %v1402, %v1403
    %1406 = vrot.lane.b32.xlu0 %v1404, 96
    %v1407 = vpop.permute.xlu0 %1406
    %v1408 = vsel %vm188, %v1407, 0
    %1410 = vmatprep.subr.mxu0 0.0
    %1411 = vmatpush1.msra.mxu0 %v1047
    %1412 = vmatprep.subr.mxu0 0.0
    %1413 = vmatpush1.msra.mxu0 %v1048
    %1414 = vmatprep.subr.mxu0 0.0
    %1415 = vmatpush1.msra.mxu0 %v1049
    %1416 = vmatprep.subr.mxu0 0.0
    %1417 = vmatpush1.msra.mxu0 %v1050
    %1418 = vmatprep.subr.mxu0 0.0
    %1419 = vmatpush1.msra.mxu0 0.0
    %1420 = vmatprep.subr.mxu0 0.0
    %1421 = vmatpush1.msra.mxu0 0.0
    %1422 = vmatprep.subr.mxu0 0.0
    %1423 = vmatpush1.msra.mxu0 0.0
    %1424 = vmatprep.subr.mxu0 0.0
    %1425 = vmatpush1.msra.mxu0 0.0
    %1426 = vmatprep.subr.mxu0 0.0
    %1427 = vmatpush1.msra.mxu0 0.0
    %1428 = vmatprep.subr.mxu0 0.0
    %1429 = vmatpush1.msra.mxu0 0.0
    %1430 = vmatprep.subr.mxu0 0.0
    %1431 = vmatpush1.msra.mxu0 0.0
    %1432 = vmatprep.subr.mxu0 0.0
    %1433 = vmatpush1.msra.mxu0 0.0
    %1434 = vmatprep.subr.mxu0 0.0
    %1435 = vmatpush1.msra.mxu0 0.0
    %1436 = vmatprep.subr.mxu0 0.0
    %1437 = vmatpush1.msra.mxu0 0.0
    %1438 = vmatprep.subr.mxu0 0.0
    %1439 = vmatpush1.msra.mxu0 0.0
    %1440 = vmatprep.subr.mxu0 0.0
    %1441 = vmatpush1.msra.mxu0 0.0
    %1442 = vmatprep.subr.mxu0 0.0
    %1443 = vmatpush1.msra.mxu0 0.0
    %1444 = vmatprep.subr.mxu0 0.0
    %1445 = vmatpush1.msra.mxu0 0.0
    %1446 = vmatprep.subr.mxu0 0.0
    %1447 = vmatpush1.msra.mxu0 0.0
    %1448 = vmatprep.subr.mxu0 0.0
    %1449 = vmatpush1.msra.mxu0 0.0
    %1450 = vmatprep.subr.mxu0 0.0
    %1451 = vmatpush1.msra.mxu0 0.0
    %1452 = vmatprep.subr.mxu0 0.0
    %1453 = vmatpush1.msra.mxu0 0.0
    %1454 = vmatprep.subr.mxu0 0.0
    %1455 = vmatpush1.msra.mxu0 0.0
    %1456 = vmatprep.subr.mxu0 0.0
    %1457 = vmatpush1.msra.mxu0 0.0
    %1458 = vmatprep.subr.mxu0 0.0
    %1459 = vmatpush1.msra.mxu0 0.0
    %1460 = vmatprep.subr.mxu0 0.0
    %1461 = vmatpush1.msra.mxu0 0.0
    %1462 = vmatprep.subr.mxu0 0.0
    %1463 = vmatpush1.msra.mxu0 0.0
    %1464 = vmatprep.subr.mxu0 0.0
    %1465 = vmatpush1.msra.mxu0 0.0
    %1466 = vmatprep.subr.mxu0 0.0
    %1467 = vmatpush1.msra.mxu0 0.0
    %1468 = vmatprep.subr.mxu0 0.0
    %1469 = vmatpush1.msra.mxu0 0.0
    %1470 = vmatprep.subr.mxu0 0.0
    %1471 = vmatpush1.msra.mxu0 0.0
    %1472 = vmatprep.subr.mxu0 0.0
    %1473 = vmatpush1.msra.mxu0 0.0
    %1474 = vmatprep.mubr.f32.mxu0 0.0
    %1475 = vmatmul.mubr.f32.gmra.mrb[0].mxu0 %v1408
    %v1476 = vpop.f32.mrb[0].mxu0
    %v1477 = vadd.f32 0.0, %v1476
    %v1478 = vpop.f32.mrb[0].mxu0
    %1479 = vdwg.mxu0
    %v1480 = vadd.f32 %v1162, %v1477
    %v1481 = vxor.u32 %v1480, 2147483648
    %v1482 = vmul.f32 %v1481, 1.442695
    %v1483 = vpow.pop %v1482
    %v1484 = vadd.f32 %v1483, 1.0
    %v1485 = vrcp.pop %v1484
    %v1486 = vmul.f32 1.0, %v1485
    %v1487 = vadd.f32 %v1477, %v1278
    %1489 = vrot.lane.b32.xlu0 %v1487, 64
    %v1490 = vpop.permute.xlu0 %1489
    %v1492 = vmul.f32 %v1486, %v1490
    %1494 = vrot.lane.b32.xlu0 %v1492, 64
    %v1495 = vpop.permute.xlu0 %1494
    %v1497 = vadd.f32 %v1162, %v1495
    %v1498 = vtanh.pop %v1497
    %v1499 = vsub.f32 1.0, %v1486
    %1501 = vrot.lane.b32.xlu0 %v1498, 96
    %v1502 = vpop.permute.xlu0 %1501
    %v1504 = vmul.f32 %v1499, %v1502
    %v1505 = vmul.f32 %v1486, %v1404
    %v1506 = vadd.f32 %v1504, %v1505
    %1508 = vrot.lane.b32.xlu0 %v1506, 96
    %v1509 = vpop.permute.xlu0 %1508
    %v1510 = vsel %vm188, %v1509, 0
    %1512 = vmatprep.subr.mxu0 0.0
    %1513 = vmatpush1.msra.mxu0 %v1047
    %1514 = vmatprep.subr.mxu0 0.0
    %1515 = vmatpush1.msra.mxu0 %v1048
    %1516 = vmatprep.subr.mxu0 0.0
    %1517 = vmatpush1.msra.mxu0 %v1049
    %1518 = vmatprep.subr.mxu0 0.0
    %1519 = vmatpush1.msra.mxu0 %v1050
    %1520 = vmatprep.subr.mxu0 0.0
    %1521 = vmatpush1.msra.mxu0 0.0
    %1522 = vmatprep.subr.mxu0 0.0
    %1523 = vmatpush1.msra.mxu0 0.0
    %1524 = vmatprep.subr.mxu0 0.0
    %1525 = vmatpush1.msra.mxu0 0.0
    %1526 = vmatprep.subr.mxu0 0.0
    %1527 = vmatpush1.msra.mxu0 0.0
    %1528 = vmatprep.subr.mxu0 0.0
    %1529 = vmatpush1.msra.mxu0 0.0
    %1530 = vmatprep.subr.mxu0 0.0
    %1531 = vmatpush1.msra.mxu0 0.0
    %1532 = vmatprep.subr.mxu0 0.0
    %1533 = vmatpush1.msra.mxu0 0.0
    %1534 = vmatprep.subr.mxu0 0.0
    %1535 = vmatpush1.msra.mxu0 0.0
    %1536 = vmatprep.subr.mxu0 0.0
    %1537 = vmatpush1.msra.mxu0 0.0
    %1538 = vmatprep.subr.mxu0 0.0
    %1539 = vmatpush1.msra.mxu0 0.0
    %1540 = vmatprep.subr.mxu0 0.0
    %1541 = vmatpush1.msra.mxu0 0.0
    %1542 = vmatprep.subr.mxu0 0.0
    %1543 = vmatpush1.msra.mxu0 0.0
    %1544 = vmatprep.subr.mxu0 0.0
    %1545 = vmatpush1.msra.mxu0 0.0
    %1546 = vmatprep.subr.mxu0 0.0
    %1547 = vmatpush1.msra.mxu0 0.0
    %1548 = vmatprep.subr.mxu0 0.0
    %1549 = vmatpush1.msra.mxu0 0.0
    %1550 = vmatprep.subr.mxu0 0.0
    %1551 = vmatpush1.msra.mxu0 0.0
    %1552 = vmatprep.subr.mxu0 0.0
    %1553 = vmatpush1.msra.mxu0 0.0
    %1554 = vmatprep.subr.mxu0 0.0
    %1555 = vmatpush1.msra.mxu0 0.0
    %1556 = vmatprep.subr.mxu0 0.0
    %1557 = vmatpush1.msra.mxu0 0.0
    %1558 = vmatprep.subr.mxu0 0.0
    %1559 = vmatpush1.msra.mxu0 0.0
    %1560 = vmatprep.subr.mxu0 0.0
    %1561 = vmatpush1.msra.mxu0 0.0
    %1562 = vmatprep.subr.mxu0 0.0
    %1563 = vmatpush1.msra.mxu0 0.0
    %1564 = vmatprep.subr.mxu0 0.0
    %1565 = vmatpush1.msra.mxu0 0.0
    %1566 = vmatprep.subr.mxu0 0.0
    %1567 = vmatpush1.msra.mxu0 0.0
    %1568 = vmatprep.subr.mxu0 0.0
    %1569 = vmatpush1.msra.mxu0 0.0
    %1570 = vmatprep.subr.mxu0 0.0
    %1571 = vmatpush1.msra.mxu0 0.0
    %1572 = vmatprep.subr.mxu0 0.0
    %1573 = vmatpush1.msra.mxu0 0.0
    %1574 = vmatprep.subr.mxu0 0.0
    %1575 = vmatpush1.msra.mxu0 0.0
    %1576 = vmatprep.mubr.f32.mxu0 0.0
    %1577 = vmatmul.mubr.f32.gmra.mrb[0].mxu0 %v1510
    %v1578 = vpop.f32.mrb[0].mxu0
    %v1579 = vadd.f32 0.0, %v1578
    %v1580 = vpop.f32.mrb[0].mxu0
    %1581 = vdwg.mxu0
    %v1582 = vadd.f32 %v1167, %v1579
    %v1583 = vxor.u32 %v1582, 2147483648
    %v1584 = vmul.f32 %v1583, 1.442695
    %v1585 = vpow.pop %v1584
    %v1586 = vadd.f32 %v1585, 1.0
    %v1587 = vrcp.pop %v1586
    %v1588 = vmul.f32 1.0, %v1587
    %v1589 = vadd.f32 %v1579, %v1278
    %1591 = vrot.lane.b32.xlu0 %v1589, 64
    %v1592 = vpop.permute.xlu0 %1591
    %v1594 = vmul.f32 %v1588, %v1592
    %1596 = vrot.lane.b32.xlu0 %v1594, 64
    %v1597 = vpop.permute.xlu0 %1596
    %v1599 = vadd.f32 %v1167, %v1597
    %v1600 = vtanh.pop %v1599
    %v1601 = vsub.f32 1.0, %v1588
    %1603 = vrot.lane.b32.xlu0 %v1600, 96
    %v1604 = vpop.permute.xlu0 %1603
    %v1606 = vmul.f32 %v1601, %v1604
    %v1607 = vmul.f32 %v1588, %v1506
    %v1608 = vadd.f32 %v1606, %v1607
    %1610 = vrot.lane.b32.xlu0 %v1608, 96
    %v1611 = vpop.permute.xlu0 %1610
    %v1612 = vsel %vm188, %v1611, 0
    %1614 = vmatprep.subr.mxu0 0.0
    %1615 = vmatpush1.msra.mxu0 %v1047
    %1616 = vmatprep.subr.mxu0 0.0
    %1617 = vmatpush1.msra.mxu0 %v1048
    %1618 = vmatprep.subr.mxu0 0.0
    %1619 = vmatpush1.msra.mxu0 %v1049
    %1620 = vmatprep.subr.mxu0 0.0
    %1621 = vmatpush1.msra.mxu0 %v1050
    %1622 = vmatprep.subr.mxu0 0.0
    %1623 = vmatpush1.msra.mxu0 0.0
    %1624 = vmatprep.subr.mxu0 0.0
    %1625 = vmatpush1.msra.mxu0 0.0
    %1626 = vmatprep.subr.mxu0 0.0
    %1627 = vmatpush1.msra.mxu0 0.0
    %1628 = vmatprep.subr.mxu0 0.0
    %1629 = vmatpush1.msra.mxu0 0.0
    %1630 = vmatprep.subr.mxu0 0.0
    %1631 = vmatpush1.msra.mxu0 0.0
    %1632 = vmatprep.subr.mxu0 0.0
    %1633 = vmatpush1.msra.mxu0 0.0
    %1634 = vmatprep.subr.mxu0 0.0
    %1635 = vmatpush1.msra.mxu0 0.0
    %1636 = vmatprep.subr.mxu0 0.0
    %1637 = vmatpush1.msra.mxu0 0.0
    %1638 = vmatprep.subr.mxu0 0.0
    %1639 = vmatpush1.msra.mxu0 0.0
    %1640 = vmatprep.subr.mxu0 0.0
    %1641 = vmatpush1.msra.mxu0 0.0
    %1642 = vmatprep.subr.mxu0 0.0
    %1643 = vmatpush1.msra.mxu0 0.0
    %1644 = vmatprep.subr.mxu0 0.0
    %1645 = vmatpush1.msra.mxu0 0.0
    %1646 = vmatprep.subr.mxu0 0.0
    %1647 = vmatpush1.msra.mxu0 0.0
    %1648 = vmatprep.subr.mxu0 0.0
    %1649 = vmatpush1.msra.mxu0 0.0
    %1650 = vmatprep.subr.mxu0 0.0
    %1651 = vmatpush1.msra.mxu0 0.0
    %1652 = vmatprep.subr.mxu0 0.0
    %1653 = vmatpush1.msra.mxu0 0.0
    %1654 = vmatprep.subr.mxu0 0.0
    %1655 = vmatpush1.msra.mxu0 0.0
    %1656 = vmatprep.subr.mxu0 0.0
    %1657 = vmatpush1.msra.mxu0 0.0
    %1658 = vmatprep.subr.mxu0 0.0
    %1659 = vmatpush1.msra.mxu0 0.0
    %1660 = vmatprep.subr.mxu0 0.0
    %1661 = vmatpush1.msra.mxu0 0.0
    %1662 = vmatprep.subr.mxu0 0.0
    %1663 = vmatpush1.msra.mxu0 0.0
    %1664 = vmatprep.subr.mxu0 0.0
    %1665 = vmatpush1.msra.mxu0 0.0
    %1666 = vmatprep.subr.mxu0 0.0
    %1667 = vmatpush1.msra.mxu0 0.0
    %1668 = vmatprep.subr.mxu0 0.0
    %1669 = vmatpush1.msra.mxu0 0.0
    %1670 = vmatprep.subr.mxu0 0.0
    %1671 = vmatpush1.msra.mxu0 0.0
    %1672 = vmatprep.subr.mxu0 0.0
    %1673 = vmatpush1.msra.mxu0 0.0
    %1674 = vmatprep.subr.mxu0 0.0
    %1675 = vmatpush1.msra.mxu0 0.0
    %1676 = vmatprep.subr.mxu0 0.0
    %1677 = vmatpush1.msra.mxu0 0.0
    %1678 = vmatprep.mubr.f32.mxu0 0.0
    %1679 = vmatmul.mubr.f32.gmra.mrb[0].mxu0 %v1612
    %v1680 = vpop.f32.mrb[0].mxu0
    %v1681 = vadd.f32 0.0, %v1680
    %v1682 = vpop.f32.mrb[0].mxu0
    %1683 = vdwg.mxu0
    %v1684 = vadd.f32 %v1172, %v1681
    %v1685 = vxor.u32 %v1684, 2147483648
    %v1686 = vmul.f32 %v1685, 1.442695
    %v1687 = vpow.pop %v1686
    %v1688 = vadd.f32 %v1687, 1.0
    %v1689 = vrcp.pop %v1688
    %v1690 = vmul.f32 1.0, %v1689
    %v1691 = vadd.f32 %v1681, %v1278
    %1693 = vrot.lane.b32.xlu0 %v1691, 64
    %v1694 = vpop.permute.xlu0 %1693
    %v1696 = vmul.f32 %v1690, %v1694
    %1698 = vrot.lane.b32.xlu0 %v1696, 64
    %v1699 = vpop.permute.xlu0 %1698
    %v1701 = vadd.f32 %v1172, %v1699
    %v1702 = vtanh.pop %v1701
    %v1703 = vsub.f32 1.0, %v1690
    %1705 = vrot.lane.b32.xlu0 %v1702, 96
    %v1706 = vpop.permute.xlu0 %1705
    %v1708 = vmul.f32 %v1703, %v1706
    %v1709 = vmul.f32 %v1690, %v1608
    %v1710 = vadd.f32 %v1708, %v1709
    %1712 = vrot.lane.b32.xlu0 %v1710, 96
    %v1713 = vpop.permute.xlu0 %1712
    %v1714 = vsel %vm188, %v1713, 0
    %1716 = vmatprep.subr.mxu0 0.0
    %1717 = vmatpush1.msra.mxu0 %v1047
    %1718 = vmatprep.subr.mxu0 0.0
    %1719 = vmatpush1.msra.mxu0 %v1048
    %1720 = vmatprep.subr.mxu0 0.0
    %1721 = vmatpush1.msra.mxu0 %v1049
    %1722 = vmatprep.subr.mxu0 0.0
    %1723 = vmatpush1.msra.mxu0 %v1050
    %1724 = vmatprep.subr.mxu0 0.0
    %1725 = vmatpush1.msra.mxu0 0.0
    %1726 = vmatprep.subr.mxu0 0.0
    %1727 = vmatpush1.msra.mxu0 0.0
    %1728 = vmatprep.subr.mxu0 0.0
    %1729 = vmatpush1.msra.mxu0 0.0
    %1730 = vmatprep.subr.mxu0 0.0
    %1731 = vmatpush1.msra.mxu0 0.0
    %1732 = vmatprep.subr.mxu0 0.0
    %1733 = vmatpush1.msra.mxu0 0.0
    %1734 = vmatprep.subr.mxu0 0.0
    %1735 = vmatpush1.msra.mxu0 0.0
    %1736 = vmatprep.subr.mxu0 0.0
    %1737 = vmatpush1.msra.mxu0 0.0
    %1738 = vmatprep.subr.mxu0 0.0
    %1739 = vmatpush1.msra.mxu0 0.0
    %1740 = vmatprep.subr.mxu0 0.0
    %1741 = vmatpush1.msra.mxu0 0.0
    %1742 = vmatprep.subr.mxu0 0.0
    %1743 = vmatpush1.msra.mxu0 0.0
    %1744 = vmatprep.subr.mxu0 0.0
    %1745 = vmatpush1.msra.mxu0 0.0
    %1746 = vmatprep.subr.mxu0 0.0
    %1747 = vmatpush1.msra.mxu0 0.0
    %1748 = vmatprep.subr.mxu0 0.0
    %1749 = vmatpush1.msra.mxu0 0.0
    %1750 = vmatprep.subr.mxu0 0.0
    %1751 = vmatpush1.msra.mxu0 0.0
    %1752 = vmatprep.subr.mxu0 0.0
    %1753 = vmatpush1.msra.mxu0 0.0
    %1754 = vmatprep.subr.mxu0 0.0
    %1755 = vmatpush1.msra.mxu0 0.0
    %1756 = vmatprep.subr.mxu0 0.0
    %1757 = vmatpush1.msra.mxu0 0.0
    %1758 = vmatprep.subr.mxu0 0.0
    %1759 = vmatpush1.msra.mxu0 0.0
    %1760 = vmatprep.subr.mxu0 0.0
    %1761 = vmatpush1.msra.mxu0 0.0
    %1762 = vmatprep.subr.mxu0 0.0
    %1763 = vmatpush1.msra.mxu0 0.0
    %1764 = vmatprep.subr.mxu0 0.0
    %1765 = vmatpush1.msra.mxu0 0.0
    %1766 = vmatprep.subr.mxu0 0.0
    %1767 = vmatpush1.msra.mxu0 0.0
    %1768 = vmatprep.subr.mxu0 0.0
    %1769 = vmatpush1.msra.mxu0 0.0
    %1770 = vmatprep.subr.mxu0 0.0
    %1771 = vmatpush1.msra.mxu0 0.0
    %1772 = vmatprep.subr.mxu0 0.0
    %1773 = vmatpush1.msra.mxu0 0.0
    %1774 = vmatprep.subr.mxu0 0.0
    %1775 = vmatpush1.msra.mxu0 0.0
    %1776 = vmatprep.subr.mxu0 0.0
    %1777 = vmatpush1.msra.mxu0 0.0
    %1778 = vmatprep.subr.mxu0 0.0
    %1779 = vmatpush1.msra.mxu0 0.0
    %1780 = vmatprep.mubr.f32.mxu0 0.0
    %1781 = vmatmul.mubr.f32.gmra.mrb[0].mxu0 %v1714
    %v1782 = vpop.f32.mrb[0].mxu0
    %v1783 = vadd.f32 0.0, %v1782
    %v1784 = vpop.f32.mrb[0].mxu0
    %1785 = vdwg.mxu0
    %v1786 = vadd.f32 %v1177, %v1783
    %v1787 = vxor.u32 %v1786, 2147483648
    %v1788 = vmul.f32 %v1787, 1.442695
    %v1789 = vpow.pop %v1788
    %v1790 = vadd.f32 %v1789, 1.0
    %v1791 = vrcp.pop %v1790
    %v1792 = vmul.f32 1.0, %v1791
    %v1793 = vadd.f32 %v1783, %v1278
    %1795 = vrot.lane.b32.xlu0 %v1793, 64
    %v1796 = vpop.permute.xlu0 %1795
    %v1798 = vmul.f32 %v1792, %v1796
    %1800 = vrot.lane.b32.xlu0 %v1798, 64
    %v1801 = vpop.permute.xlu0 %1800
    %v1803 = vadd.f32 %v1177, %v1801
    %v1804 = vtanh.pop %v1803
    %v1805 = vsub.f32 1.0, %v1792
    %1807 = vrot.lane.b32.xlu0 %v1804, 96
    %v1808 = vpop.permute.xlu0 %1807
    %v1810 = vmul.f32 %v1805, %v1808
    %v1811 = vmul.f32 %v1792, %v1710
    %v1812 = vadd.f32 %v1810, %v1811
    %1814 = vrot.lane.b32.xlu0 %v1812, 96
    %v1815 = vpop.permute.xlu0 %1814
    %v1816 = vsel %vm188, %v1815, 0
    %1818 = vmatprep.subr.mxu0 0.0
    %1819 = vmatpush1.msra.mxu0 %v1047
    %1820 = vmatprep.subr.mxu0 0.0
    %1821 = vmatpush1.msra.mxu0 %v1048
    %1822 = vmatprep.subr.mxu0 0.0
    %1823 = vmatpush1.msra.mxu0 %v1049
    %1824 = vmatprep.subr.mxu0 0.0
    %1825 = vmatpush1.msra.mxu0 %v1050
    %1826 = vmatprep.subr.mxu0 0.0
    %1827 = vmatpush1.msra.mxu0 0.0
    %1828 = vmatprep.subr.mxu0 0.0
    %1829 = vmatpush1.msra.mxu0 0.0
    %1830 = vmatprep.subr.mxu0 0.0
    %1831 = vmatpush1.msra.mxu0 0.0
    %1832 = vmatprep.subr.mxu0 0.0
    %1833 = vmatpush1.msra.mxu0 0.0
    %1834 = vmatprep.subr.mxu0 0.0
    %1835 = vmatpush1.msra.mxu0 0.0
    %1836 = vmatprep.subr.mxu0 0.0
    %1837 = vmatpush1.msra.mxu0 0.0
    %1838 = vmatprep.subr.mxu0 0.0
    %1839 = vmatpush1.msra.mxu0 0.0
    %1840 = vmatprep.subr.mxu0 0.0
    %1841 = vmatpush1.msra.mxu0 0.0
    %1842 = vmatprep.subr.mxu0 0.0
    %1843 = vmatpush1.msra.mxu0 0.0
    %1844 = vmatprep.subr.mxu0 0.0
    %1845 = vmatpush1.msra.mxu0 0.0
    %1846 = vmatprep.subr.mxu0 0.0
    %1847 = vmatpush1.msra.mxu0 0.0
    %1848 = vmatprep.subr.mxu0 0.0
    %1849 = vmatpush1.msra.mxu0 0.0
    %1850 = vmatprep.subr.mxu0 0.0
    %1851 = vmatpush1.msra.mxu0 0.0
    %1852 = vmatprep.subr.mxu0 0.0
    %1853 = vmatpush1.msra.mxu0 0.0
    %1854 = vmatprep.subr.mxu0 0.0
    %1855 = vmatpush1.msra.mxu0 0.0
    %1856 = vmatprep.subr.mxu0 0.0
    %1857 = vmatpush1.msra.mxu0 0.0
    %1858 = vmatprep.subr.mxu0 0.0
    %1859 = vmatpush1.msra.mxu0 0.0
    %1860 = vmatprep.subr.mxu0 0.0
    %1861 = vmatpush1.msra.mxu0 0.0
    %1862 = vmatprep.subr.mxu0 0.0
    %1863 = vmatpush1.msra.mxu0 0.0
    %1864 = vmatprep.subr.mxu0 0.0
    %1865 = vmatpush1.msra.mxu0 0.0
    %1866 = vmatprep.subr.mxu0 0.0
    %1867 = vmatpush1.msra.mxu0 0.0
    %1868 = vmatprep.subr.mxu0 0.0
    %1869 = vmatpush1.msra.mxu0 0.0
    %1870 = vmatprep.subr.mxu0 0.0
    %1871 = vmatpush1.msra.mxu0 0.0
    %1872 = vmatprep.subr.mxu0 0.0
    %1873 = vmatpush1.msra.mxu0 0.0
    %1874 = vmatprep.subr.mxu0 0.0
    %1875 = vmatpush1.msra.mxu0 0.0
    %1876 = vmatprep.subr.mxu0 0.0
    %1877 = vmatpush1.msra.mxu0 0.0
    %1878 = vmatprep.subr.mxu0 0.0
    %1879 = vmatpush1.msra.mxu0 0.0
    %1880 = vmatprep.subr.mxu0 0.0
    %1881 = vmatpush1.msra.mxu0 0.0
    %1882 = vmatprep.mubr.f32.mxu0 0.0
    %1883 = vmatmul.mubr.f32.gmra.mrb[0].mxu0 %v1816
    %v1884 = vpop.f32.mrb[0].mxu0
    %v1885 = vadd.f32 0.0, %v1884
    %v1886 = vpop.f32.mrb[0].mxu0
    %1887 = vdwg.mxu0
    %v1888 = vadd.f32 %v1182, %v1885
    %v1889 = vxor.u32 %v1888, 2147483648
    %v1890 = vmul.f32 %v1889, 1.442695
    %v1891 = vpow.pop %v1890
    %v1892 = vadd.f32 %v1891, 1.0
    %v1893 = vrcp.pop %v1892
    %v1894 = vmul.f32 1.0, %v1893
    %v1895 = vadd.f32 %v1885, %v1278
    %1897 = vrot.lane.b32.xlu0 %v1895, 64
    %v1898 = vpop.permute.xlu0 %1897
    %v1900 = vmul.f32 %v1894, %v1898
    %1902 = vrot.lane.b32.xlu0 %v1900, 64
    %v1903 = vpop.permute.xlu0 %1902
    %v1905 = vadd.f32 %v1182, %v1903
    %v1906 = vtanh.pop %v1905
    %v1907 = vsub.f32 1.0, %v1894
    %1909 = vrot.lane.b32.xlu0 %v1906, 96
    %v1910 = vpop.permute.xlu0 %1909
    %v1912 = vmul.f32 %v1907, %v1910
    %v1913 = vmul.f32 %v1894, %v1812
    %v1914 = vadd.f32 %v1912, %v1913
    %1916 = vrot.lane.b32.xlu0 %v1914, 96
    %v1917 = vpop.permute.xlu0 %1916
    %v1918 = vsel %vm188, %v1917, 0
    %1920 = vmatprep.subr.mxu0 0.0
    %1921 = vmatpush1.msra.mxu0 %v1047
    %1922 = vmatprep.subr.mxu0 0.0
    %1923 = vmatpush1.msra.mxu0 %v1048
    %1924 = vmatprep.subr.mxu0 0.0
    %1925 = vmatpush1.msra.mxu0 %v1049
    %1926 = vmatprep.subr.mxu0 0.0
    %1927 = vmatpush1.msra.mxu0 %v1050
    %1928 = vmatprep.subr.mxu0 0.0
    %1929 = vmatpush1.msra.mxu0 0.0
    %1930 = vmatprep.subr.mxu0 0.0
    %1931 = vmatpush1.msra.mxu0 0.0
    %1932 = vmatprep.subr.mxu0 0.0
    %1933 = vmatpush1.msra.mxu0 0.0
    %1934 = vmatprep.subr.mxu0 0.0
    %1935 = vmatpush1.msra.mxu0 0.0
    %1936 = vmatprep.subr.mxu0 0.0
    %1937 = vmatpush1.msra.mxu0 0.0
    %1938 = vmatprep.subr.mxu0 0.0
    %1939 = vmatpush1.msra.mxu0 0.0
    %1940 = vmatprep.subr.mxu0 0.0
    %1941 = vmatpush1.msra.mxu0 0.0
    %1942 = vmatprep.subr.mxu0 0.0
    %1943 = vmatpush1.msra.mxu0 0.0
    %1944 = vmatprep.subr.mxu0 0.0
    %1945 = vmatpush1.msra.mxu0 0.0
    %1946 = vmatprep.subr.mxu0 0.0
    %1947 = vmatpush1.msra.mxu0 0.0
    %1948 = vmatprep.subr.mxu0 0.0
    %1949 = vmatpush1.msra.mxu0 0.0
    %1950 = vmatprep.subr.mxu0 0.0
    %1951 = vmatpush1.msra.mxu0 0.0
    %1952 = vmatprep.subr.mxu0 0.0
    %1953 = vmatpush1.msra.mxu0 0.0
    %1954 = vmatprep.subr.mxu0 0.0
    %1955 = vmatpush1.msra.mxu0 0.0
    %1956 = vmatprep.subr.mxu0 0.0
    %1957 = vmatpush1.msra.mxu0 0.0
    %1958 = vmatprep.subr.mxu0 0.0
    %1959 = vmatpush1.msra.mxu0 0.0
    %1960 = vmatprep.subr.mxu0 0.0
    %1961 = vmatpush1.msra.mxu0 0.0
    %1962 = vmatprep.subr.mxu0 0.0
    %1963 = vmatpush1.msra.mxu0 0.0
    %1964 = vmatprep.subr.mxu0 0.0
    %1965 = vmatpush1.msra.mxu0 0.0
    %1966 = vmatprep.subr.mxu0 0.0
    %1967 = vmatpush1.msra.mxu0 0.0
    %1968 = vmatprep.subr.mxu0 0.0
    %1969 = vmatpush1.msra.mxu0 0.0
    %1970 = vmatprep.subr.mxu0 0.0
    %1971 = vmatpush1.msra.mxu0 0.0
    %1972 = vmatprep.subr.mxu0 0.0
    %1973 = vmatpush1.msra.mxu0 0.0
    %1974 = vmatprep.subr.mxu0 0.0
    %1975 = vmatpush1.msra.mxu0 0.0
    %1976 = vmatprep.subr.mxu0 0.0
    %1977 = vmatpush1.msra.mxu0 0.0
    %1978 = vmatprep.subr.mxu0 0.0
    %1979 = vmatpush1.msra.mxu0 0.0
    %1980 = vmatprep.subr.mxu0 0.0
    %1981 = vmatpush1.msra.mxu0 0.0
    %1982 = vmatprep.subr.mxu0 0.0
    %1983 = vmatpush1.msra.mxu0 0.0
    %1984 = vmatprep.mubr.f32.mxu0 0.0
    %1985 = vmatmul.mubr.f32.gmra.mrb[0].mxu0 %v1918
    %v1986 = vpop.f32.mrb[0].mxu0
    %v1987 = vadd.f32 0.0, %v1986
    %v1988 = vpop.f32.mrb[0].mxu0
    %1989 = vdwg.mxu0
    %v1990 = vadd.f32 %v1187, %v1987
    %v1991 = vxor.u32 %v1990, 2147483648
    %v1992 = vmul.f32 %v1991, 1.442695
    %v1993 = vpow.pop %v1992
    %v1994 = vadd.f32 %v1993, 1.0
    %v1995 = vrcp.pop %v1994
    %v1996 = vmul.f32 1.0, %v1995
    %v1997 = vadd.f32 %v1987, %v1278
    %1999 = vrot.lane.b32.xlu0 %v1997, 64
    %v2000 = vpop.permute.xlu0 %1999
    %v2002 = vmul.f32 %v1996, %v2000
    %2004 = vrot.lane.b32.xlu0 %v2002, 64
    %v2005 = vpop.permute.xlu0 %2004
    %v2007 = vadd.f32 %v1187, %v2005
    %v2008 = vtanh.pop %v2007
    %v2009 = vsub.f32 1.0, %v1996
    %2011 = vrot.lane.b32.xlu0 %v2008, 96
    %v2012 = vpop.permute.xlu0 %2011
    %v2014 = vmul.f32 %v2009, %v2012
    %v2015 = vmul.f32 %v1996, %v1914
    %v2016 = vadd.f32 %v2014, %v2015
    %2018 = vrot.lane.b32.xlu0 %v2016, 96
    %v2019 = vpop.permute.xlu0 %2018
    %s2021 = scalar_lea.vmem [#allocation3], 8
    %2022 = vst.msk [vmem:[%s2021] sm:$0xff] %vm188, %v2019
    %v2023 = vmax.f32 %v2016, 0.0
    %v2024 = vld [vmem:[%s7] sm:$0xff]
    %v2025 = vld [vmem:[%s7 + $0x8] sm:$0xff]
    %v2026 = vld [vmem:[%s7 + $0x10] sm:$0xff]
    %v2027 = vld [vmem:[%s7 + $0x18] sm:$0xff]
    %v2028 = vld [vmem:[%s8] sm:$0x1]
    %v2030 = vlaneseq
    %v2031 = vshrl.u32 %v2030, 7
    %v2032 = vsub.s32 0, %v2031
    %v2033 = vrot.slane %v2028, %v2032
    %2036 = vrot.lane.b32.xlu0 %v2023, 96
    %v2037 = vpop.permute.xlu0 %2036
    %v2038 = vsel %vm188, %v2037, 0
    %2040 = vmatprep.subr.mxu0 0.0
    %2041 = vmatpush1.msra.mxu0 %v2024
    %2042 = vmatprep.subr.mxu0 0.0
    %2043 = vmatpush1.msra.mxu0 %v2025
    %2044 = vmatprep.subr.mxu0 0.0
    %2045 = vmatpush1.msra.mxu0 %v2026
    %2046 = vmatprep.subr.mxu0 0.0
    %2047 = vmatpush1.msra.mxu0 %v2027
    %2048 = vmatprep.subr.mxu0 0.0
    %2049 = vmatpush1.msra.mxu0 0.0
    %2050 = vmatprep.subr.mxu0 0.0
    %2051 = vmatpush1.msra.mxu0 0.0
    %2052 = vmatprep.subr.mxu0 0.0
    %2053 = vmatpush1.msra.mxu0 0.0
    %2054 = vmatprep.subr.mxu0 0.0
    %2055 = vmatpush1.msra.mxu0 0.0
    %2056 = vmatprep.subr.mxu0 0.0
    %2057 = vmatpush1.msra.mxu0 0.0
    %2058 = vmatprep.subr.mxu0 0.0
    %2059 = vmatpush1.msra.mxu0 0.0
    %2060 = vmatprep.subr.mxu0 0.0
    %2061 = vmatpush1.msra.mxu0 0.0
    %2062 = vmatprep.subr.mxu0 0.0
    %2063 = vmatpush1.msra.mxu0 0.0
    %2064 = vmatprep.subr.mxu0 0.0
    %2065 = vmatpush1.msra.mxu0 0.0
    %2066 = vmatprep.subr.mxu0 0.0
    %2067 = vmatpush1.msra.mxu0 0.0
    %2068 = vmatprep.subr.mxu0 0.0
    %2069 = vmatpush1.msra.mxu0 0.0
    %2070 = vmatprep.subr.mxu0 0.0
    %2071 = vmatpush1.msra.mxu0 0.0
    %2072 = vmatprep.subr.mxu0 0.0
    %2073 = vmatpush1.msra.mxu0 0.0
    %2074 = vmatprep.subr.mxu0 0.0
    %2075 = vmatpush1.msra.mxu0 0.0
    %2076 = vmatprep.subr.mxu0 0.0
    %2077 = vmatpush1.msra.mxu0 0.0
    %2078 = vmatprep.subr.mxu0 0.0
    %2079 = vmatpush1.msra.mxu0 0.0
    %2080 = vmatprep.subr.mxu0 0.0
    %2081 = vmatpush1.msra.mxu0 0.0
    %2082 = vmatprep.subr.mxu0 0.0
    %2083 = vmatpush1.msra.mxu0 0.0
    %2084 = vmatprep.subr.mxu0 0.0
    %2085 = vmatpush1.msra.mxu0 0.0
    %2086 = vmatprep.subr.mxu0 0.0
    %2087 = vmatpush1.msra.mxu0 0.0
    %2088 = vmatprep.subr.mxu0 0.0
    %2089 = vmatpush1.msra.mxu0 0.0
    %2090 = vmatprep.subr.mxu0 0.0
    %2091 = vmatpush1.msra.mxu0 0.0
    %2092 = vmatprep.subr.mxu0 0.0
    %2093 = vmatpush1.msra.mxu0 0.0
    %2094 = vmatprep.subr.mxu0 0.0
    %2095 = vmatpush1.msra.mxu0 0.0
    %2096 = vmatprep.subr.mxu0 0.0
    %2097 = vmatpush1.msra.mxu0 0.0
    %2098 = vmatprep.subr.mxu0 0.0
    %2099 = vmatpush1.msra.mxu0 0.0
    %2100 = vmatprep.subr.mxu0 0.0
    %2101 = vmatpush1.msra.mxu0 0.0
    %2102 = vmatprep.subr.mxu0 0.0
    %2103 = vmatpush1.msra.mxu0 0.0
    %2104 = vmatprep.mubr.f32.mxu0 0.0
    %2105 = vmatmul.mubr.f32.gmra.mrb[0].mxu0 %v2038
    %v2106 = vpop.f32.mrb[0].mxu0
    %v2107 = vadd.f32 %v2033, %v2106
    %v2108 = vpop.f32.mrb[0].mxu0
    %2109 = vdwg.mxu0
    %vm2110 = vcmask 31744
    %2111 = vst.msk [vmem:[%s9] sm:$0xff] %vm2110, %v2107
    // Predicated region
    $region38: #{gru_net_forward.1} parent=1 // pred_check
      _
    $region39: #{gru_net_forward.1} parent=1 // pred_check_branch
      %2113 = sbr.rel (0) target = $region41
    $region40: #{gru_net_forward.1} parent=1 // pred_region
      _
    $region41: #{gru_net_forward.1} parent=1 // pred_fallthru
      _
    // Predicated region
    $region42: #{gru_net_forward.1} parent=1 // pred_check
      _
    $region43: #{gru_net_forward.1} parent=1 // pred_check_branch
      %2115 = sbr.rel (0) target = $region45
    $region44: #{gru_net_forward.1} parent=1 // pred_region
      %s2117 = ssub.s32 256, 256
      %2118 = vsyncadd [#allocation4], %s2117
      %s2119 = sshll.u32 [#allocation3], 4
      %s2120 = int_to_ptr.vmem [resolvable:$true] %s2119
      %2125 = dma.vmem_to_hbm [thread:$0]  %s2120, 256, %s10, [#allocation4], 128, 128, 8
    $region45: #{gru_net_forward.1} parent=1 // pred_fallthru
      _
    // Predicated region
    $region46: #{gru_net_forward.1} parent=1 // pred_check
      _
    $region47: #{gru_net_forward.1} parent=1 // pred_check_branch
      %2127 = sbr.rel (0) target = $region49
    $region48: #{gru_net_forward.1} parent=1 // pred_region
      _
    $region49: #{gru_net_forward.1} parent=1 // pred_fallthru
      _
    // Predicated region
    $region50: #{gru_net_forward.1} parent=1 // pred_check
      _
    $region51: #{gru_net_forward.1} parent=1 // pred_check_branch
      %2129 = sbr.rel (0) target = $region53
    $region52: #{gru_net_forward.1} parent=1 // pred_region
      %2130 = dma.done [#allocation4], 256
    $region53: #{gru_net_forward.1} parent=1 // pred_fallthru
      _
    %2131 = vsyncpa [#allocation4], 1

</llo_original>
